<compile_context>
chip_gen: v7x
topology: tpu7x:2x2x1
jax: 0.10.0
libtpu: 0.0.40
codegen_flags: <defaults>
</compile_context>

<pallas_src>
import functools
import numpy as np

import jax
import jax.numpy as jnp
from jax.experimental import pallas as pl
from jax.experimental.pallas import tpu as pltpu


# ----------------------------------------------------------------------------
# Helpers
# ----------------------------------------------------------------------------
def _round_up(x, m):
    return ((x + m - 1) // m) * m


def _pick_tile(dim, cands):
    for c in cands:
        if dim % c == 0:
            return c
    return dim


# ----------------------------------------------------------------------------
# Pallas kernels: tiled bf16 MXU matmul with f32 accumulation
# ----------------------------------------------------------------------------
def _matmul_kernel(a_ref, b_ref, o_ref, acc_ref):
    @pl.when(pl.program_id(2) == 0)
    def _():
        acc_ref[...] = jnp.zeros_like(acc_ref)

    acc_ref[...] += jnp.dot(a_ref[...], b_ref[...],
                            preferred_element_type=jnp.float32)

    @pl.when(pl.program_id(2) == pl.num_programs(2) - 1)
    def _():
        o_ref[...] = acc_ref[...]


def pallas_matmul(a, b):
    """(M, K) @ (K, N) -> (M, N) f32; bf16 MXU operands, f32 accumulation."""
    M, K = a.shape
    K2, N = b.shape
    assert K == K2
    a = a.astype(jnp.bfloat16)
    b = b.astype(jnp.bfloat16)

    # M padded to >=256 rows keeps the 256-wide MXU full and the grid short.
    Mp = _round_up(M, 256)
    Kp = _round_up(K, 256)
    Np = _round_up(N, 128)
    if (Mp, Kp) != (M, K):
        a = jnp.pad(a, ((0, Mp - M), (0, Kp - K)))
    if (Kp, Np) != (K, N):
        b = jnp.pad(b, ((0, Kp - K), (0, Np - N)))

    tm = _pick_tile(Mp, (512, 256))
    tk = _pick_tile(Kp, (512, 256))
    tn = _pick_tile(Np, (512, 256, 128))
    # Keep >=2 parallel output blocks when M collapses to a single tile
    # (tiny decoder / ASPP spatial maps) so both TensorCores on v7x get work.
    if Mp // tm == 1 and Np // tn < 2:
        for c in (256, 128):
            if Np % c == 0 and Np // c >= 2:
                tn = c
                break
    grid = (Mp // tm, Np // tn, Kp // tk)

    # VMEM budget (double-buffered): 2*(tm*tk + tk*tn)*2B + 2*tm*tn*4B + acc
    # <= ~5 MiB at 512^3 — well inside every generation's scoped limit.
    out = pl.pallas_call(
        _matmul_kernel,
        out_shape=jax.ShapeDtypeStruct((Mp, Np), jnp.float32),
        grid_spec=pltpu.PrefetchScalarGridSpec(
            num_scalar_prefetch=0,
            grid=grid,
            in_specs=[pl.BlockSpec((tm, tk), lambda i, j, k: (i, k)),
                      pl.BlockSpec((tk, tn), lambda i, j, k: (k, j))],
            out_specs=pl.BlockSpec((tm, tn), lambda i, j, k: (i, j)),
            scratch_shapes=[pltpu.VMEM((tm, tn), jnp.float32)],
        ),
        compiler_params=pltpu.CompilerParams(
            dimension_semantics=("parallel", "parallel", "arbitrary"),
            vmem_limit_bytes=32 * 1024 * 1024),
    )(a, b)
    if (Mp, Np) != (M, N):
        out = out[:M, :N]
    return out


# ----------------------------------------------------------------------------
# Pallas kernels: tiled train-mode BatchNorm (+ fused residual / ReLU)
# ----------------------------------------------------------------------------
def _bn_stats_kernel(x_ref, s_ref, q_ref):
    # Tiled single-pass per-channel sum and sum-of-squares reduction.
    @pl.when(pl.program_id(0) == 0)
    def _():
        s_ref[...] = jnp.zeros_like(s_ref)
        q_ref[...] = jnp.zeros_like(q_ref)

    x = x_ref[...]
    s_ref[...] += jnp.sum(x, axis=0, keepdims=True)
    q_ref[...] += jnp.sum(x * x, axis=0, keepdims=True)


def _bn_apply_base(x_ref, scale_ref, shift_ref, o_ref, *, relu):
    y = x_ref[...] * scale_ref[...] + shift_ref[...]
    if relu:
        y = jnp.maximum(y, 0.0)
    o_ref[...] = y


_bn_apply_relu_kernel = functools.partial(_bn_apply_base, relu=True)
_bn_apply_norelu_kernel = functools.partial(_bn_apply_base, relu=False)


def _bn_apply_res_relu_kernel(x_ref, scale_ref, shift_ref, r_ref, o_ref):
    # Fused: BN(x) + residual, then ReLU (bottleneck epilogue).
    y = x_ref[...] * scale_ref[...] + shift_ref[...] + r_ref[...]
    o_ref[...] = jnp.maximum(y, 0.0)


def _bn_tile_m(M, C):
    # Target ~1 MiB f32 blocks so BN never overflows VMEM, on any generation.
    tm = 1024
    while tm > 8 and tm * C * 4 > (1 << 20):
        tm //= 2
    return max(8, min(tm, _round_up(M, 8)))


def batchnorm2d(x, gamma, beta, relu=True, residual=None):
    """Train-mode BatchNorm2d on NHWC input, tiled over N*H*W.

    If `residual` is given, computes relu(BN(x) + residual) in one pass.
    """
    N, H, W, C = x.shape
    M = N * H * W
    xm = x.reshape(M, C).astype(jnp.float32)

    tm = _bn_tile_m(M, C)
    Mp = _round_up(M, tm)
    xp = jnp.pad(xm, ((0, Mp - M), (0, 0))) if Mp != M else xm
    grid = (Mp // tm,)

    # Pass 1: per-channel sum / sum-of-squares (zero-padding is benign).
    s, q = pl.pallas_call(
        _bn_stats_kernel,
        out_shape=(jax.ShapeDtypeStruct((1, C), jnp.float32),
                   jax.ShapeDtypeStruct((1, C), jnp.float32)),
        grid_spec=pltpu.PrefetchScalarGridSpec(
            num_scalar_prefetch=0,
            grid=grid,
            in_specs=[pl.BlockSpec((tm, C), lambda i: (i, 0))],
            out_specs=[pl.BlockSpec((1, C), lambda i: (0, 0)),
                       pl.BlockSpec((1, C), lambda i: (0, 0))],
        ),
        compiler_params=pltpu.CompilerParams(
            dimension_semantics=("arbitrary",)),
    )(xp)

    mean = s / M
    var = q / M - mean * mean                       # biased variance
    scale = gamma.reshape(1, C).astype(jnp.float32) * jax.lax.rsqrt(var + 1e-5)
    shift = beta.reshape(1, C).astype(jnp.float32) - mean * scale

    ins = [xp, scale, shift]
    in_specs = [pl.BlockSpec((tm, C), lambda i: (i, 0)),
                pl.BlockSpec((1, C), lambda i: (0, 0)),
                pl.BlockSpec((1, C), lambda i: (0, 0))]
    if residual is not None:
        rm = residual.reshape(M, C).astype(jnp.float32)
        rp = jnp.pad(rm, ((0, Mp - M), (0, 0))) if Mp != M else rm
        ins.append(rp)
        in_specs.append(pl.BlockSpec((tm, C), lambda i: (i, 0)))
        kern = _bn_apply_res_relu_kernel
    else:
        kern = _bn_apply_relu_kernel if relu else _bn_apply_norelu_kernel

    # Pass 2: tiled normalize (+ residual add + ReLU).
    out = pl.pallas_call(
        kern,
        out_shape=jax.ShapeDtypeStruct((Mp, C), jnp.float32),
        grid_spec=pltpu.PrefetchScalarGridSpec(
            num_scalar_prefetch=0,
            grid=grid,
            in_specs=in_specs,
            out_specs=pl.BlockSpec((tm, C), lambda i: (i, 0)),
        ),
        compiler_params=pltpu.CompilerParams(
            dimension_semantics=("parallel",)),
    )(*ins)
    if Mp != M:
        out = out[:M]
    return out.reshape(N, H, W, C)


# ----------------------------------------------------------------------------
# Conv (bf16 im2col + Pallas matmul), pooling, resize
# ----------------------------------------------------------------------------
def conv2d(x, w, stride=1, padding=0, dilation=1):
    """x: NHWC, w: (kh, kw, Cin, Cout). Matches torch Conv2d (bias=False)."""
    N, H, W, Cin = x.shape
    kh, kw, _, Cout = w.shape
    Ho = (H + 2 * padding - dilation * (kh - 1) - 1) // stride + 1
    Wo = (W + 2 * padding - dilation * (kw - 1) - 1) // stride + 1

    xb = x.astype(jnp.bfloat16)          # bf16 MXU operands (f32 accumulation)
    wb = w.astype(jnp.bfloat16)

    if kh == 1 and kw == 1 and stride == 1 and padding == 0:
        A = xb.reshape(N * H * W, Cin)   # 1x1 conv: no im2col, pure reshape
    else:
        xp = jnp.pad(xb, ((0, 0), (padding, padding), (padding, padding), (0, 0)))
        cols = []
        for i in range(kh):
            for j in range(kw):
                hs = i * dilation
                ws = j * dilation
                cols.append(xp[:,
                               hs:hs + (Ho - 1) * stride + 1:stride,
                               ws:ws + (Wo - 1) * stride + 1:stride, :])
        # TODO(synk): im2col patches are still materialized in HBM (now bf16,
        # half the bytes); fully fusing the shifted-window gather into the
        # matmul BlockSpec index_map would remove the kh*kw traffic blowup.
        patches = jnp.stack(cols, axis=3)            # (N, Ho, Wo, kh*kw, Cin)
        A = patches.reshape(N * Ho * Wo, kh * kw * Cin)

    B = wb.reshape(kh * kw * Cin, Cout)
    out = pallas_matmul(A, B)
    return out.reshape(N, Ho, Wo, Cout)


def maxpool_3x3_s2_p1(x):
    # TODO(synk): max-pool kept as plain-JAX reduce_window glue (tiny, runs once).
    return jax.lax.reduce_window(
        x, -jnp.inf, jax.lax.max,
        window_dimensions=(1, 3, 3, 1), window_strides=(1, 2, 2, 1),
        padding=((0, 0), (1, 1), (1, 1), (0, 0)))


def bilinear_resize(x, h, w):
    # jax.image.resize 'bilinear' uses half-pixel centers == align_corners=False.
    return jax.image.resize(x, (x.shape[0], h, w, x.shape[3]), method="bilinear")


# ----------------------------------------------------------------------------
# Deterministic synthetic parameters (shapes match resnet101 + Net.__init__)
# ----------------------------------------------------------------------------
_KEY = jax.random.PRNGKey(1234)
_CNT = [0]


def conv_w(kh, kw, cin, cout):
    _CNT[0] += 1
    k = jax.random.fold_in(_KEY, _CNT[0])
    fan_in = kh * kw * cin
    return (jax.random.normal(k, (kh, kw, cin, cout), jnp.float32)
            * np.sqrt(2.0 / fan_in))


def bn_p(c):
    return jnp.ones((c,), jnp.float32), jnp.zeros((c,), jnp.float32)


def make_bottleneck(inplanes, planes, stride, downsample):
    p = {
        "conv1": conv_w(1, 1, inplanes, planes), "bn1": bn_p(planes),
        "conv2": conv_w(3, 3, planes, planes), "bn2": bn_p(planes),
        "conv3": conv_w(1, 1, planes, planes * 4), "bn3": bn_p(planes * 4),
        "stride": stride,
    }
    if downsample:
        p["down_conv"] = conv_w(1, 1, inplanes, planes * 4)
        p["down_bn"] = bn_p(planes * 4)
    return p


def make_layer(inplanes, planes, blocks, stride):
    layer = [make_bottleneck(inplanes, planes, stride, True)]
    for _ in range(blocks - 1):
        layer.append(make_bottleneck(planes * 4, planes, 1, False))
    return layer


def make_params():
    p = {}
    # ResNet-101 encoder (synthetic weights; pretrained checkpoint not loaded)
    p["conv1"] = conv_w(7, 7, 3, 64)
    p["bn1"] = bn_p(64)
    p["layer1"] = make_layer(64, 64, 3, 1)
    p["layer2"] = make_layer(256, 128, 4, 2)
    p["layer3"] = make_layer(512, 256, 23, 2)
    p["layer4"] = make_layer(1024, 512, 3, 2)
    # ASPP
    p["aspp"] = [(conv_w(3, 3, 2048, 512), bn_p(512)) for _ in range(5)]
    # Squeeze
    p["squeeze"] = (conv_w(3, 3, 2560, 512), bn_p(512))
    # Skip connections (1x1)
    p["skip"] = [(conv_w(1, 1, 1024, 512), bn_p(512)),
                 (conv_w(1, 1, 512, 256), bn_p(256)),
                 (conv_w(1, 1, 256, 128), bn_p(128))]
    # Squeeze-upsample (3x3)
    p["squeezeup"] = [(conv_w(3, 3, 1024, 512), bn_p(512)),
                      (conv_w(3, 3, 256 + 512, 256), bn_p(256)),
                      (conv_w(3, 3, 256 + 128, 256), bn_p(256))]
    # Final XYZ head
    p["xyz"] = conv_w(3, 3, 256, 3)
    return p


# ----------------------------------------------------------------------------
# Forward pass (semantics of Net.forward, TrainMode=True)
# ----------------------------------------------------------------------------
def bottleneck_fwd(x, p):
    identity = x
    out = conv2d(x, p["conv1"])
    out = batchnorm2d(out, *p["bn1"], relu=True)
    out = conv2d(out, p["conv2"], stride=p["stride"], padding=1)
    out = batchnorm2d(out, *p["bn2"], relu=True)
    out = conv2d(out, p["conv3"])
    if "down_conv" in p:
        identity = conv2d(x, p["down_conv"], stride=p["stride"])
        identity = batchnorm2d(identity, *p["down_bn"], relu=False)
    # relu(BN(out) + identity) fused into one Pallas pass
    return batchnorm2d(out, *p["bn3"], relu=True, residual=identity)


def net_forward(images_nhwc, params, train_mode=True):
    """images_nhwc: (N, H, W, 3) float — same array the torch module receives."""
    rgb_mean = jnp.array([123.68, 116.779, 103.939], jnp.float32)
    rgb_std = jnp.array([65.0, 65.0, 65.0], jnp.float32)
    x = (images_nhwc.astype(jnp.float32) - rgb_mean) / rgb_std

    # --- encoder (ResNet-101) ---
    x = conv2d(x, params["conv1"], stride=2, padding=3)
    x = batchnorm2d(x, *params["bn1"], relu=True)
    x = maxpool_3x3_s2_p1(x)
    skips = []
    for blk in params["layer1"]:
        x = bottleneck_fwd(x, blk)
    skips.append(x)
    for blk in params["layer2"]:
        x = bottleneck_fwd(x, blk)
    skips.append(x)
    for blk in params["layer3"]:
        x = bottleneck_fwd(x, blk)
    skips.append(x)
    for blk in params["layer4"]:
        x = bottleneck_fwd(x, blk)
    encoder_map = x

    # --- ASPP ---
    scales = [1, 2, 4, 12, 16]
    aspp_feats = []
    for scale, (w, bn) in zip(scales, params["aspp"]):
        y = conv2d(encoder_map, w, padding=scale, dilation=scale)
        y = batchnorm2d(y, *bn, relu=True)
        aspp_feats.append(y)
    # TODO(synk): channel concat is materialized before the squeeze conv; it
    # could be avoided by per-branch K-accumulating matmuls into one output.
    x = jnp.concatenate(aspp_feats, axis=-1)          # channel cat (dim=1 in NCHW)
    x = conv2d(x, params["squeeze"][0], padding=1)
    x = batchnorm2d(x, *params["squeeze"][1], relu=True)

    # --- decoder with skip connections ---
    for i in range(3):
        skip = skips[-1 - i]
        x = bilinear_resize(x, skip.shape[1], skip.shape[2])
        sk = conv2d(skip, params["skip"][i][0])
        sk = batchnorm2d(sk, *params["skip"][i][1], relu=True)
        x = jnp.concatenate([sk, x], axis=-1)
        x = conv2d(x, params["squeezeup"][i][0], padding=1)
        x = batchnorm2d(x, *params["squeezeup"][i][1], relu=True)

    x = conv2d(x, params["xyz"], padding=1)
    if not train_mode:
        x = bilinear_resize(x, images_nhwc.shape[1], images_nhwc.shape[2])

    # return NCHW to match the PyTorch module's output layout
    return jnp.transpose(x, (0, 3, 1, 2))


# ----------------------------------------------------------------------------
if __name__ == "__main__":
    params = make_params()

    key = jax.random.PRNGKey(0)
    # Images as the torch module expects them: (N, H, W, 3), 0..255 pixel values.
    images = jax.random.uniform(key, (2, 64, 64, 3), jnp.float32,
                                minval=0.0, maxval=255.0)

    xyz_map = net_forward(images, params, train_mode=True)
    xyz_map = jax.block_until_ready(xyz_map)

    assert xyz_map.shape == (2, 3, 16, 16), xyz_map.shape
    assert bool(jnp.all(jnp.isfinite(xyz_map)))
    print("KERNEL_OK")
</pallas_src>

<mosaic_0001>
module attributes {stable_mosaic.version = 11 : i64} {
  func.func @_matmul_kernel(%arg0: i32, %arg1: i32, %arg2: i32, %arg3: memref<512x256xbf16, #tpu.memory_space<vmem>>, %arg4: memref<256x128xbf16, #tpu.memory_space<vmem>>, %arg5: memref<512x128xf32, #tpu.memory_space<vmem>>, %arg6: memref<512x128xf32, #tpu.memory_space<vmem>>) attributes {dimension_semantics = [#tpu.dimension_semantics<parallel>, #tpu.dimension_semantics<parallel>, #tpu.dimension_semantics<arbitrary>], iteration_bounds = array<i64: 4, 1, 1>, scalar_prefetch = 0 : i64, scratch_operands = 1 : i64, tpu.core_type = #tpu.core_type<tc>, window_params = [{transform_indices = @transform_0, window_bounds = array<i64: 512, 256>}, {transform_indices = @transform_1, window_bounds = array<i64: 256, 128>}, {transform_indices = @transform_2, window_bounds = array<i64: 512, 128>}]} {
    %c0_i32 = arith.constant 0 : i32
    %0 = arith.cmpi eq, %arg2, %c0_i32 : i32
    %1 = arith.extui %0 : i1 to i32
    %c0_i32_0 = arith.constant 0 : i32
    %2 = arith.cmpi ne, %1, %c0_i32_0 : i32
    scf.if %2 {
      %cst_10 = arith.constant 0.000000e+00 : f32
      %12 = vector.broadcast %cst_10 : f32 to vector<512x128xf32>
      %c0_11 = arith.constant 0 : index
      %c0_12 = arith.constant 0 : index
      %13 = vector.load %arg6[%c0_11, %c0_12] : memref<512x128xf32, #tpu.memory_space<vmem>>, vector<512x128xf32>
      tpu.vector_store %arg6[%c0_11, %c0_12], %12 {strides = array<i32>} : memref<512x128xf32, #tpu.memory_space<vmem>>, vector<512x128xf32>,
    } else {
    }
    %c0 = arith.constant 0 : index
    %c0_1 = arith.constant 0 : index
    %3 = vector.load %arg6[%c0, %c0_1] : memref<512x128xf32, #tpu.memory_space<vmem>>, vector<512x128xf32>
    %c0_2 = arith.constant 0 : index
    %c0_3 = arith.constant 0 : index
    %4 = vector.load %arg3[%c0_2, %c0_3] : memref<512x256xbf16, #tpu.memory_space<vmem>>, vector<512x256xbf16>
    %c0_4 = arith.constant 0 : index
    %c0_5 = arith.constant 0 : index
    %5 = vector.load %arg4[%c0_4, %c0_5] : memref<256x128xbf16, #tpu.memory_space<vmem>>, vector<256x128xbf16>
    %cst = arith.constant dense<0.000000e+00> : vector<512x128xf32>
    %6 = tpu.matmul %4, %5, %cst {dimension_numbers = #tpu.dot_dimension_numbers<[1], [0], [0], [1], [0, 0, 1, 1], [], []>} : vector<512x256xbf16>, vector<256x128xbf16>, vector<512x128xf32> -> vector<512x128xf32>
    %7 = arith.addf %3, %6 : vector<512x128xf32>
    %c0_6 = arith.constant 0 : index
    %c0_7 = arith.constant 0 : index
    %8 = vector.load %arg6[%c0_6, %c0_7] : memref<512x128xf32, #tpu.memory_space<vmem>>, vector<512x128xf32>
    tpu.vector_store %arg6[%c0_6, %c0_7], %7 {strides = array<i32>} : memref<512x128xf32, #tpu.memory_space<vmem>>, vector<512x128xf32>,
    %c0_i32_8 = arith.constant 0 : i32
    %9 = arith.cmpi eq, %arg2, %c0_i32_8 : i32
    %10 = arith.extui %9 : i1 to i32
    %c0_i32_9 = arith.constant 0 : i32
    %11 = arith.cmpi ne, %10, %c0_i32_9 : i32
    scf.if %11 {
      %c0_10 = arith.constant 0 : index
      %c0_11 = arith.constant 0 : index
      %12 = vector.load %arg6[%c0_10, %c0_11] : memref<512x128xf32, #tpu.memory_space<vmem>>, vector<512x128xf32>
      %c0_12 = arith.constant 0 : index
      %c0_13 = arith.constant 0 : index
      %13 = vector.load %arg5[%c0_12, %c0_13] : memref<512x128xf32, #tpu.memory_space<vmem>>, vector<512x128xf32>
      tpu.vector_store %arg5[%c0_12, %c0_13], %12 {strides = array<i32>} : memref<512x128xf32, #tpu.memory_space<vmem>>, vector<512x128xf32>,
    } else {
    }
    return
  }
  func.func @transform_0(%arg0: i32, %arg1: i32, %arg2: i32) -> (i32, i32) {
    %c0_i32 = arith.constant 0 : i32
    return %arg0, %arg2 : i32, i32
  }
  func.func @transform_1(%arg0: i32, %arg1: i32, %arg2: i32) -> (i32, i32) {
    %c0_i32 = arith.constant 0 : i32
    return %arg2, %arg1 : i32, i32
  }
  func.func @transform_2(%arg0: i32, %arg1: i32, %arg2: i32) -> (i32, i32) {
    %c0_i32 = arith.constant 0 : i32
    return %arg0, %arg1 : i32, i32
  }
}

</mosaic_0001>

<llo_original>
// kernel: tpu_custom_call.1
$region0: #{tpu_custom_call.1}
  #allocation0 [shape = 'u32[]', space=smem, size = 0x4, offset = 0x4, fixed_abs, tag = 'smem constant byte address 0x4 - core index']
  #allocation1 [shape = 'u32[144,128]{1,0:T(1,128)}', space=vmem, size = 0x12000, scoped, tag = 'internal scratch']
  #allocation2 [shape = 'f32[512,128]{1,0:T(8,128)}', space=vmem, size = 0x40000, scoped, tag = 'scratch operand']
  %s0 = inlined_call_operand.hbm [shape: bf16[2048,256], index: 0, kind: input, shape index: {}]
  %s1 = inlined_call_operand.hbm [shape: bf16[256,128], index: 1, kind: input, shape index: {}]
  %s2 = inlined_call_operand.hbm [shape: f32[2048,128], index: 2, kind: output, shape index: {}]
  %s3 = sld [smem:[#allocation0]]
  $region57: #{tpu_custom_call.1} parent=0
    _
  %s5 = ssub.s32 1, %s3
  %s6 = scalar_select 0, %s5, %s3
  $region1: #{tpu_custom_call.1} parent=0
    #allocation3 [shape = 'u8[524288]{0}', space=vmem, size = 0x80000, scoped, tag = 'input window, operand 0']
    #allocation4 [shape = 's32[2]{0}', space=sflag, size = 0x8, scoped, tag = 'scoped memory for tpu_custom_call.1']
    #allocation5 [shape = 's32[2]{0}', space=sflag, size = 0x8, scoped, tag = 'scoped memory for tpu_custom_call.1']
    #allocation6 [shape = 'u8[65536]{0}', space=vmem, size = 0x10000, scoped, tag = 'input window, operand 1, single buffered']
    #allocation7 [shape = 's32[1]{0}', space=sflag, size = 0x4, scoped, tag = 'scoped memory for tpu_custom_call.1']
    #allocation8 [shape = 'u8[524288]{0}', space=vmem, size = 0x80000, scoped, tag = 'output window, operand 0']
    %7 = vsyncpa [#allocation4], 0
    %s8 = scalar_lea.sflag [#allocation4], 1
    %9 = vsyncpa %s8, 0
    %10 = vsyncpa [#allocation7], 0
    %11 = vsyncpa [#allocation5], 0
    %s12 = scalar_lea.sflag [#allocation5], 1
    %13 = vsyncpa %s12, 0
    loop: start=0, step=1, limit=6
    $region2: #{tpu_custom_call.1} parent=1 // loop_pre_header
      _
    $region3: #{tpu_custom_call.1} parent=1 // loop_header
      %s15 = sphi 0, %s19
      %p16 = scmp.ge.s32.totalorder %s15, 6
      %s22 = sphi 0, %s41
      %s23 = sphi 0, %s37
      %s24 = sphi 0, %s33
      %s25 = sphi 0, %s22
      %s26 = sphi 0, %s23
      %s27 = sphi 0, %s24
      %s28 = sphi 0, %s25
      %s29 = sphi 0, %s26
      %s30 = sphi 0, %s27
      %s46 = sphi 0, %s48
      %s49 = sphi 0, %s46
      %s50 = sphi 0, %s49
      %s66 = sphi 0, %s50
      %s74 = sphi 0, %s76
      %s77 = sphi 0, %s74
      %s78 = sphi 0, %s77
      %s94 = sphi 0, %s78
      %s102 = sphi 0, %s104
      %s105 = sphi 0, %s102
      %s106 = sphi 0, %s105
      %s122 = sphi 0, %s106
    $region4: #{tpu_custom_call.1} parent=1 // loop_header_branch
      %18 = sbr.rel (%p16) target = $region8
    $region5: #{tpu_custom_call.1} parent=1 // loop_body
      %s20 = ssub.s32 %s15, 1
      %s21 = ssub.s32 %s15, 2
      %s31 = sadd.s32 1, %s24
      %p32 = scmp.ge.s32.totalorder %s31, 1
      %s33 = scalar_select %p32, 0, %s31
      %s34 = sadd.s32 1, %s23
      %s35 = scalar_select %p32, %s34, %s23
      %p36 = scmp.ge.s32.totalorder %s35, 1
      %s37 = scalar_select %p36, 0, %s35
      %s38 = sadd.s32 1, %s22
      %s39 = scalar_select %p36, %s38, %s22
      %p40 = scmp.ge.s32.totalorder %s39, 4
      %s41 = scalar_select %p40, 0, %s39
      %s42 = ssub.s32 %s22, %s41
      %s43 = ssub.s32 %s24, %s33
      %s44 = sor.u32 %s42, %s43
      %p45 = scmp.eq.s32.totalorder %s44, 0
      %s47 = sadd.s32 %s46, 1
      %s48 = scalar_select %p45, %s46, %s47
      %p51 = pneg %p45
      %p52 = scmp.eq.s32.totalorder %s15, 3
      %p53 = por %p51, %p52
      %p54 = scmp.ne.s32.totalorder %s46, %s49
      %p55 = scmp.eq.s32.totalorder %s15, 0
      %p56 = por %p54, %p55
      %p57 = scmp.ne.s32.totalorder %s46, %s49
      %p58 = scmp.eq.s32.totalorder %s20, 3
      %p59 = por %p57, %p58
      %p60 = scmp.ne.s32.totalorder %s49, %s50
      %p61 = scmp.eq.s32.totalorder %s20, 0
      %p62 = por %p60, %p61
      %p63 = scmp.ne.s32.totalorder %s49, %s50
      %p64 = scmp.eq.s32.totalorder %s21, 3
      %p65 = por %p63, %p64
      %p67 = scmp.ne.s32.totalorder %s50, %s66
      %p68 = scmp.eq.s32.totalorder %s21, 0
      %p69 = por %p67, %p68
      %s70 = ssub.s32 %s24, %s33
      %s71 = ssub.s32 %s23, %s37
      %s72 = sor.u32 %s70, %s71
      %p73 = scmp.eq.s32.totalorder %s72, 0
      %s75 = sadd.s32 %s74, 1
      %s76 = scalar_select %p73, %s74, %s75
      %p79 = pneg %p73
      %p80 = scmp.eq.s32.totalorder %s15, 3
      %p81 = por %p79, %p80
      %p82 = scmp.ne.s32.totalorder %s74, %s77
      %p83 = scmp.eq.s32.totalorder %s15, 0
      %p84 = por %p82, %p83
      %p85 = scmp.ne.s32.totalorder %s74, %s77
      %p86 = scmp.eq.s32.totalorder %s20, 3
      %p87 = por %p85, %p86
      %p88 = scmp.ne.s32.totalorder %s77, %s78
      %p89 = scmp.eq.s32.totalorder %s20, 0
      %p90 = por %p88, %p89
      %p91 = scmp.ne.s32.totalorder %s77, %s78
      %p92 = scmp.eq.s32.totalorder %s21, 3
      %p93 = por %p91, %p92
      %p95 = scmp.ne.s32.totalorder %s78, %s94
      %p96 = scmp.eq.s32.totalorder %s21, 0
      %p97 = por %p95, %p96
      %s98 = ssub.s32 %s22, %s41
      %s99 = ssub.s32 %s23, %s37
      %s100 = sor.u32 %s98, %s99
      %p101 = scmp.eq.s32.totalorder %s100, 0
      %s103 = sadd.s32 %s102, 1
      %s104 = scalar_select %p101, %s102, %s103
      %p107 = pneg %p101
      %p108 = scmp.eq.s32.totalorder %s15, 3
      %p109 = por %p107, %p108
      %p110 = scmp.ne.s32.totalorder %s102, %s105
      %p111 = scmp.eq.s32.totalorder %s15, 0
      %p112 = por %p110, %p111
      %p113 = scmp.ne.s32.totalorder %s102, %s105
      %p114 = scmp.eq.s32.totalorder %s20, 3
      %p115 = por %p113, %p114
      %p116 = scmp.ne.s32.totalorder %s105, %s106
      %p117 = scmp.eq.s32.totalorder %s20, 0
      %p118 = por %p116, %p117
      %p119 = scmp.ne.s32.totalorder %s105, %s106
      %p120 = scmp.eq.s32.totalorder %s21, 3
      %p121 = por %p119, %p120
      %p123 = scmp.ne.s32.totalorder %s106, %s122
      %p124 = scmp.eq.s32.totalorder %s21, 0
      %p125 = por %p123, %p124
      %p126 = scmp.le.s32.totalorder 1, %s15
      %p127 = scmp.lt.s32.totalorder %s15, 5
      %p128 = pnand %p126, %p127
      %p129 = pneg %p128
      // Predicated region
      $region9: #{tpu_custom_call.1} parent=5 // pred_check
        _
      $region10: #{tpu_custom_call.1} parent=5 // pred_check_branch
        %131 = sbr.rel (%p128) target = $region12
      $region11: #{tpu_custom_call.1} parent=5 // pred_region
        %s132 = ssub.s32 %s15, 1
        // Predicated region
        $region13: #{tpu_custom_call.1} parent=11 // pred_check
          %p133 = pneg %p90
        $region14: #{tpu_custom_call.1} parent=11 // pred_check_branch
          %135 = sbr.rel (%p133) target = $region16
        $region15: #{tpu_custom_call.1} parent=11 // pred_region
          %s136 = smul.u32 32, %s27
          %s138 = ssub.s32 2048, 2048
          %139 = vsyncadd [#allocation7], %s138
          %s140 = sadd.s32 %s26, %s136
          %s141 = smul.addr %s140, 64
          %s142 = scalar_lea.hbm %s1, %s141
          %s143 = sshll.u32 [#allocation6], 4
          %s144 = int_to_ptr.vmem [resolvable:$true] %s143
          %149 = dma.hbm_to_vmem [thread:$0]  %s142, 2048, %s144, [#allocation7], 64, 64, 4
        $region16: #{tpu_custom_call.1} parent=11 // pred_fallthru
          _
      $region12: #{tpu_custom_call.1} parent=5 // pred_fallthru
        _
      %p150 = scmp.lt.s32.totalorder %s15, 4
      // Predicated region
      $region17: #{tpu_custom_call.1} parent=5 // pred_check
        %p151 = pneg %p150
      $region18: #{tpu_custom_call.1} parent=5 // pred_check_branch
        %153 = sbr.rel (%p151) target = $region20
      $region19: #{tpu_custom_call.1} parent=5 // pred_region
        // Predicated region
        $region21: #{tpu_custom_call.1} parent=19 // pred_check
          %p154 = pneg %p56
        $region22: #{tpu_custom_call.1} parent=19 // pred_check_branch
          %156 = sbr.rel (%p154) target = $region24
        $region23: #{tpu_custom_call.1} parent=19 // pred_region
          %s157 = sand.u32 %s46, 1
          %s158 = scalar_lea.sflag [#allocation4], %s157
          %s159 = sand.u32 %s46, 1
          %s160 = smul.addr %s159, 512
          %s161 = scalar_lea.vmem [#allocation3], %s160
          %s162 = smul.u32 64, %s22
          %s163 = smul.u32 2, %s24
          %s165 = ssub.s32 8192, 8192
          %166 = vsyncadd %s158, %s165
          %s167 = smul.addr %s162, 2
          %s168 = sadd.s32 %s163, %s167
          %s169 = smul.addr %s168, 64
          %s170 = scalar_lea.hbm %s0, %s169
          %s171 = sshll.u32 %s161, 4
          %s172 = int_to_ptr.vmem [resolvable:$true] %s171
          %177 = dma.hbm_to_vmem [thread:$0]  %s170, 8192, %s172, %s158, 128, 128, 8
        $region24: #{tpu_custom_call.1} parent=19 // pred_fallthru
          _
      $region20: #{tpu_custom_call.1} parent=5 // pred_fallthru
        _
      %p178 = scmp.le.s32.totalorder 1, %s15
      %p179 = scmp.lt.s32.totalorder %s15, 5
      %p180 = pnand %p178, %p179
      %p181 = pneg %p180
      // Predicated region
      $region25: #{tpu_custom_call.1} parent=5 // pred_check
        _
      $region26: #{tpu_custom_call.1} parent=5 // pred_check_branch
        %183 = sbr.rel (%p180) target = $region28
      $region27: #{tpu_custom_call.1} parent=5 // pred_region
        %s184 = ssub.s32 %s15, 1
        %s185 = sand.u32 %s49, 1
        %s186 = scalar_lea.sflag [#allocation4], %s185
        %s187 = sand.u32 %s49, 1
        %s188 = smul.addr %s187, 512
        %s189 = scalar_lea.vmem [#allocation3], %s188
        // Predicated region
        $region29: #{tpu_custom_call.1} parent=27 // pred_check
          %p190 = pneg %p62
        $region30: #{tpu_custom_call.1} parent=27 // pred_check_branch
          %192 = sbr.rel (%p190) target = $region32
        $region31: #{tpu_custom_call.1} parent=27 // pred_region
          %193 = dma.done %s186, 8192
        $region32: #{tpu_custom_call.1} parent=27 // pred_fallthru
          _
        // Predicated region
        $region33: #{tpu_custom_call.1} parent=27 // pred_check
          %p194 = pneg %p90
        $region34: #{tpu_custom_call.1} parent=27 // pred_check_branch
          %196 = sbr.rel (%p194) target = $region36
        $region35: #{tpu_custom_call.1} parent=27 // pred_region
          %197 = dma.done [#allocation7], 2048
        $region36: #{tpu_custom_call.1} parent=27 // pred_fallthru
          _
        %s198 = sand.u32 %s49, 1
        %s199 = scalar_lea.sflag [#allocation4], %s198
        %s200 = sand.u32 %s49, 1
        %s201 = smul.addr %s200, 512
        %s202 = scalar_lea.vmem [#allocation3], %s201
        %p203 = pneg %p62
        %p204 = pneg %p59
        %p205 = pneg %p90
        %p206 = pneg %p87
        %p207 = pneg %p118
        %p208 = pneg %p115
        %s209 = sand.u32 %s105, 1
        %s210 = scalar_lea.sflag [#allocation5], %s209
        %s211 = sand.u32 %s105, 1
        %s212 = smul.addr %s211, 512
        %s213 = scalar_lea.vmem [#allocation8], %s212
        %s214 = smul.u32 64, %s25
        %s215 = smul.u32 2, %s27
        %s216 = smul.u32 32, %s27
        %s217 = smul.u32 64, %s25
        %p219 = scmp.eq.s32.totalorder %s27, 0
        // Predicated region
        $region37: #{tpu_custom_call.1} parent=27 // pred_check
          %p220 = pneg %p219
        $region38: #{tpu_custom_call.1} parent=27 // pred_check_branch
          %222 = sbr.rel (%p220) target = $region40
        $region39: #{tpu_custom_call.1} parent=27 // pred_region
          %223 = vst [vmem:[#allocation2] sm:$0xff] 0.0
          %224 = vst [vmem:[#allocation2 + $0x8] sm:$0xff] 0.0
          %225 = vst [vmem:[#allocation2 + $0x10] sm:$0xff] 0.0
          %226 = vst [vmem:[#allocation2 + $0x18] sm:$0xff] 0.0
          %227 = vst [vmem:[#allocation2 + $0x20] sm:$0xff] 0.0
          %228 = vst [vmem:[#allocation2 + $0x28] sm:$0xff] 0.0
          %229 = vst [vmem:[#allocation2 + $0x30] sm:$0xff] 0.0
          %230 = vst [vmem:[#allocation2 + $0x38] sm:$0xff] 0.0
          %231 = vst [vmem:[#allocation2 + $0x40] sm:$0xff] 0.0
          %232 = vst [vmem:[#allocation2 + $0x48] sm:$0xff] 0.0
          %233 = vst [vmem:[#allocation2 + $0x50] sm:$0xff] 0.0
          %234 = vst [vmem:[#allocation2 + $0x58] sm:$0xff] 0.0
          %235 = vst [vmem:[#allocation2 + $0x60] sm:$0xff] 0.0
          %236 = vst [vmem:[#allocation2 + $0x68] sm:$0xff] 0.0
          %237 = vst [vmem:[#allocation2 + $0x70] sm:$0xff] 0.0
          %238 = vst [vmem:[#allocation2 + $0x78] sm:$0xff] 0.0
          %239 = vst [vmem:[#allocation2 + $0x80] sm:$0xff] 0.0
          %240 = vst [vmem:[#allocation2 + $0x88] sm:$0xff] 0.0
          %241 = vst [vmem:[#allocation2 + $0x90] sm:$0xff] 0.0
          %242 = vst [vmem:[#allocation2 + $0x98] sm:$0xff] 0.0
          %243 = vst [vmem:[#allocation2 + $0xa0] sm:$0xff] 0.0
          %244 = vst [vmem:[#allocation2 + $0xa8] sm:$0xff] 0.0
          %245 = vst [vmem:[#allocation2 + $0xb0] sm:$0xff] 0.0
          %246 = vst [vmem:[#allocation2 + $0xb8] sm:$0xff] 0.0
          %247 = vst [vmem:[#allocation2 + $0xc0] sm:$0xff] 0.0
          %248 = vst [vmem:[#allocation2 + $0xc8] sm:$0xff] 0.0
          %249 = vst [vmem:[#allocation2 + $0xd0] sm:$0xff] 0.0
          %250 = vst [vmem:[#allocation2 + $0xd8] sm:$0xff] 0.0
          %251 = vst [vmem:[#allocation2 + $0xe0] sm:$0xff] 0.0
          %252 = vst [vmem:[#allocation2 + $0xe8] sm:$0xff] 0.0
          %253 = vst [vmem:[#allocation2 + $0xf0] sm:$0xff] 0.0
          %254 = vst [vmem:[#allocation2 + $0xf8] sm:$0xff] 0.0
          %255 = vst [vmem:[#allocation2 + $0x100] sm:$0xff] 0.0
          %256 = vst [vmem:[#allocation2 + $0x108] sm:$0xff] 0.0
          %257 = vst [vmem:[#allocation2 + $0x110] sm:$0xff] 0.0
          %258 = vst [vmem:[#allocation2 + $0x118] sm:$0xff] 0.0
          %259 = vst [vmem:[#allocation2 + $0x120] sm:$0xff] 0.0
          %260 = vst [vmem:[#allocation2 + $0x128] sm:$0xff] 0.0
          %261 = vst [vmem:[#allocation2 + $0x130] sm:$0xff] 0.0
          %262 = vst [vmem:[#allocation2 + $0x138] sm:$0xff] 0.0
          %263 = vst [vmem:[#allocation2 + $0x140] sm:$0xff] 0.0
          %264 = vst [vmem:[#allocation2 + $0x148] sm:$0xff] 0.0
          %265 = vst [vmem:[#allocation2 + $0x150] sm:$0xff] 0.0
          %266 = vst [vmem:[#allocation2 + $0x158] sm:$0xff] 0.0
          %267 = vst [vmem:[#allocation2 + $0x160] sm:$0xff] 0.0
          %268 = vst [vmem:[#allocation2 + $0x168] sm:$0xff] 0.0
          %269 = vst [vmem:[#allocation2 + $0x170] sm:$0xff] 0.0
          %270 = vst [vmem:[#allocation2 + $0x178] sm:$0xff] 0.0
          %271 = vst [vmem:[#allocation2 + $0x180] sm:$0xff] 0.0
          %272 = vst [vmem:[#allocation2 + $0x188] sm:$0xff] 0.0
          %273 = vst [vmem:[#allocation2 + $0x190] sm:$0xff] 0.0
          %274 = vst [vmem:[#allocation2 + $0x198] sm:$0xff] 0.0
          %275 = vst [vmem:[#allocation2 + $0x1a0] sm:$0xff] 0.0
          %276 = vst [vmem:[#allocation2 + $0x1a8] sm:$0xff] 0.0
          %277 = vst [vmem:[#allocation2 + $0x1b0] sm:$0xff] 0.0
          %278 = vst [vmem:[#allocation2 + $0x1b8] sm:$0xff] 0.0
          %279 = vst [vmem:[#allocation2 + $0x1c0] sm:$0xff] 0.0
          %280 = vst [vmem:[#allocation2 + $0x1c8] sm:$0xff] 0.0
          %281 = vst [vmem:[#allocation2 + $0x1d0] sm:$0xff] 0.0
          %282 = vst [vmem:[#allocation2 + $0x1d8] sm:$0xff] 0.0
          %283 = vst [vmem:[#allocation2 + $0x1e0] sm:$0xff] 0.0
          %284 = vst [vmem:[#allocation2 + $0x1e8] sm:$0xff] 0.0
          %285 = vst [vmem:[#allocation2 + $0x1f0] sm:$0xff] 0.0
          %286 = vst [vmem:[#allocation2 + $0x1f8] sm:$0xff] 0.0
        $region40: #{tpu_custom_call.1} parent=27 // pred_fallthru
          _
        %v287 = vld [vmem:[#allocation2] sm:$0xff]
        %v288 = vld [vmem:[#allocation2 + $0x8] sm:$0xff]
        %v289 = vld [vmem:[#allocation2 + $0x10] sm:$0xff]
        %v290 = vld [vmem:[#allocation2 + $0x18] sm:$0xff]
        %v291 = vld [vmem:[#allocation2 + $0x20] sm:$0xff]
        %v292 = vld [vmem:[#allocation2 + $0x28] sm:$0xff]
        %v293 = vld [vmem:[#allocation2 + $0x30] sm:$0xff]
        %v294 = vld [vmem:[#allocation2 + $0x38] sm:$0xff]
        %v295 = vld [vmem:[#allocation2 + $0x40] sm:$0xff]
        %v296 = vld [vmem:[#allocation2 + $0x48] sm:$0xff]
        %v297 = vld [vmem:[#allocation2 + $0x50] sm:$0xff]
        %v298 = vld [vmem:[#allocation2 + $0x58] sm:$0xff]
        %v299 = vld [vmem:[#allocation2 + $0x60] sm:$0xff]
        %v300 = vld [vmem:[#allocation2 + $0x68] sm:$0xff]
        %v301 = vld [vmem:[#allocation2 + $0x70] sm:$0xff]
        %v302 = vld [vmem:[#allocation2 + $0x78] sm:$0xff]
        %v303 = vld [vmem:[#allocation2 + $0x80] sm:$0xff]
        %v304 = vld [vmem:[#allocation2 + $0x88] sm:$0xff]
        %v305 = vld [vmem:[#allocation2 + $0x90] sm:$0xff]
        %v306 = vld [vmem:[#allocation2 + $0x98] sm:$0xff]
        %v307 = vld [vmem:[#allocation2 + $0xa0] sm:$0xff]
        %v308 = vld [vmem:[#allocation2 + $0xa8] sm:$0xff]
        %v309 = vld [vmem:[#allocation2 + $0xb0] sm:$0xff]
        %v310 = vld [vmem:[#allocation2 + $0xb8] sm:$0xff]
        %v311 = vld [vmem:[#allocation2 + $0xc0] sm:$0xff]
        %v312 = vld [vmem:[#allocation2 + $0xc8] sm:$0xff]
        %v313 = vld [vmem:[#allocation2 + $0xd0] sm:$0xff]
        %v314 = vld [vmem:[#allocation2 + $0xd8] sm:$0xff]
        %v315 = vld [vmem:[#allocation2 + $0xe0] sm:$0xff]
        %v316 = vld [vmem:[#allocation2 + $0xe8] sm:$0xff]
        %v317 = vld [vmem:[#allocation2 + $0xf0] sm:$0xff]
        %v318 = vld [vmem:[#allocation2 + $0xf8] sm:$0xff]
        %v319 = vld [vmem:[#allocation2 + $0x100] sm:$0xff]
        %v320 = vld [vmem:[#allocation2 + $0x108] sm:$0xff]
        %v321 = vld [vmem:[#allocation2 + $0x110] sm:$0xff]
        %v322 = vld [vmem:[#allocation2 + $0x118] sm:$0xff]
        %v323 = vld [vmem:[#allocation2 + $0x120] sm:$0xff]
        %v324 = vld [vmem:[#allocation2 + $0x128] sm:$0xff]
        %v325 = vld [vmem:[#allocation2 + $0x130] sm:$0xff]
        %v326 = vld [vmem:[#allocation2 + $0x138] sm:$0xff]
        %v327 = vld [vmem:[#allocation2 + $0x140] sm:$0xff]
        %v328 = vld [vmem:[#allocation2 + $0x148] sm:$0xff]
        %v329 = vld [vmem:[#allocation2 + $0x150] sm:$0xff]
        %v330 = vld [vmem:[#allocation2 + $0x158] sm:$0xff]
        %v331 = vld [vmem:[#allocation2 + $0x160] sm:$0xff]
        %v332 = vld [vmem:[#allocation2 + $0x168] sm:$0xff]
        %v333 = vld [vmem:[#allocation2 + $0x170] sm:$0xff]
        %v334 = vld [vmem:[#allocation2 + $0x178] sm:$0xff]
        %v335 = vld [vmem:[#allocation2 + $0x180] sm:$0xff]
        %v336 = vld [vmem:[#allocation2 + $0x188] sm:$0xff]
        %v337 = vld [vmem:[#allocation2 + $0x190] sm:$0xff]
        %v338 = vld [vmem:[#allocation2 + $0x198] sm:$0xff]
        %v339 = vld [vmem:[#allocation2 + $0x1a0] sm:$0xff]
        %v340 = vld [vmem:[#allocation2 + $0x1a8] sm:$0xff]
        %v341 = vld [vmem:[#allocation2 + $0x1b0] sm:$0xff]
        %v342 = vld [vmem:[#allocation2 + $0x1b8] sm:$0xff]
        %v343 = vld [vmem:[#allocation2 + $0x1c0] sm:$0xff]
        %v344 = vld [vmem:[#allocation2 + $0x1c8] sm:$0xff]
        %v345 = vld [vmem:[#allocation2 + $0x1d0] sm:$0xff]
        %v346 = vld [vmem:[#allocation2 + $0x1d8] sm:$0xff]
        %v347 = vld [vmem:[#allocation2 + $0x1e0] sm:$0xff]
        %v348 = vld [vmem:[#allocation2 + $0x1e8] sm:$0xff]
        %v349 = vld [vmem:[#allocation2 + $0x1f0] sm:$0xff]
        %v350 = vld [vmem:[#allocation2 + $0x1f8] sm:$0xff]
        %v351 = vld [vmem:[%s189] sm:$0xff]
        %v352 = vld [vmem:[%s189 + $0x8] sm:$0xff]
        %v353 = vld [vmem:[%s189 + $0x10] sm:$0xff]
        %v354 = vld [vmem:[%s189 + $0x18] sm:$0xff]
        %v355 = vld [vmem:[%s189 + $0x20] sm:$0xff]
        %v356 = vld [vmem:[%s189 + $0x28] sm:$0xff]
        %v357 = vld [vmem:[%s189 + $0x30] sm:$0xff]
        %v358 = vld [vmem:[%s189 + $0x38] sm:$0xff]
        %v359 = vld [vmem:[%s189 + $0x40] sm:$0xff]
        %v360 = vld [vmem:[%s189 + $0x48] sm:$0xff]
        %v361 = vld [vmem:[%s189 + $0x50] sm:$0xff]
        %v362 = vld [vmem:[%s189 + $0x58] sm:$0xff]
        %v363 = vld [vmem:[%s189 + $0x60] sm:$0xff]
        %v364 = vld [vmem:[%s189 + $0x68] sm:$0xff]
        %v365 = vld [vmem:[%s189 + $0x70] sm:$0xff]
        %v366 = vld [vmem:[%s189 + $0x78] sm:$0xff]
        %v367 = vld [vmem:[%s189 + $0x80] sm:$0xff]
        %v368 = vld [vmem:[%s189 + $0x88] sm:$0xff]
        %v369 = vld [vmem:[%s189 + $0x90] sm:$0xff]
        %v370 = vld [vmem:[%s189 + $0x98] sm:$0xff]
        %v371 = vld [vmem:[%s189 + $0xa0] sm:$0xff]
        %v372 = vld [vmem:[%s189 + $0xa8] sm:$0xff]
        %v373 = vld [vmem:[%s189 + $0xb0] sm:$0xff]
        %v374 = vld [vmem:[%s189 + $0xb8] sm:$0xff]
        %v375 = vld [vmem:[%s189 + $0xc0] sm:$0xff]
        %v376 = vld [vmem:[%s189 + $0xc8] sm:$0xff]
        %v377 = vld [vmem:[%s189 + $0xd0] sm:$0xff]
        %v378 = vld [vmem:[%s189 + $0xd8] sm:$0xff]
        %v379 = vld [vmem:[%s189 + $0xe0] sm:$0xff]
        %v380 = vld [vmem:[%s189 + $0xe8] sm:$0xff]
        %v381 = vld [vmem:[%s189 + $0xf0] sm:$0xff]
        %v382 = vld [vmem:[%s189 + $0xf8] sm:$0xff]
        %v383 = vld [vmem:[%s189 + $0x100] sm:$0xff]
        %v384 = vld [vmem:[%s189 + $0x108] sm:$0xff]
        %v385 = vld [vmem:[%s189 + $0x110] sm:$0xff]
        %v386 = vld [vmem:[%s189 + $0x118] sm:$0xff]
        %v387 = vld [vmem:[%s189 + $0x120] sm:$0xff]
        %v388 = vld [vmem:[%s189 + $0x128] sm:$0xff]
        %v389 = vld [vmem:[%s189 + $0x130] sm:$0xff]
        %v390 = vld [vmem:[%s189 + $0x138] sm:$0xff]
        %v391 = vld [vmem:[%s189 + $0x140] sm:$0xff]
        %v392 = vld [vmem:[%s189 + $0x148] sm:$0xff]
        %v393 = vld [vmem:[%s189 + $0x150] sm:$0xff]
        %v394 = vld [vmem:[%s189 + $0x158] sm:$0xff]
        %v395 = vld [vmem:[%s189 + $0x160] sm:$0xff]
        %v396 = vld [vmem:[%s189 + $0x168] sm:$0xff]
        %v397 = vld [vmem:[%s189 + $0x170] sm:$0xff]
        %v398 = vld [vmem:[%s189 + $0x178] sm:$0xff]
        %v399 = vld [vmem:[%s189 + $0x180] sm:$0xff]
        %v400 = vld [vmem:[%s189 + $0x188] sm:$0xff]
        %v401 = vld [vmem:[%s189 + $0x190] sm:$0xff]
        %v402 = vld [vmem:[%s189 + $0x198] sm:$0xff]
        %v403 = vld [vmem:[%s189 + $0x1a0] sm:$0xff]
        %v404 = vld [vmem:[%s189 + $0x1a8] sm:$0xff]
        %v405 = vld [vmem:[%s189 + $0x1b0] sm:$0xff]
        %v406 = vld [vmem:[%s189 + $0x1b8] sm:$0xff]
        %v407 = vld [vmem:[%s189 + $0x1c0] sm:$0xff]
        %v408 = vld [vmem:[%s189 + $0x1c8] sm:$0xff]
        %v409 = vld [vmem:[%s189 + $0x1d0] sm:$0xff]
        %v410 = vld [vmem:[%s189 + $0x1d8] sm:$0xff]
        %v411 = vld [vmem:[%s189 + $0x1e0] sm:$0xff]
        %v412 = vld [vmem:[%s189 + $0x1e8] sm:$0xff]
        %v413 = vld [vmem:[%s189 + $0x1f0] sm:$0xff]
        %v414 = vld [vmem:[%s189 + $0x1f8] sm:$0xff]
        %v415 = vld [vmem:[#allocation6] sm:$0xf]
        %v416 = vld [vmem:[#allocation6 + $0x4] sm:$0xf]
        %v417 = vld [vmem:[#allocation6 + $0x8] sm:$0xf]
        %v418 = vld [vmem:[#allocation6 + $0xc] sm:$0xf]
        %v419 = vld [vmem:[#allocation6 + $0x10] sm:$0xf]
        %v420 = vld [vmem:[#allocation6 + $0x14] sm:$0xf]
        %v421 = vld [vmem:[#allocation6 + $0x18] sm:$0xf]
        %v422 = vld [vmem:[#allocation6 + $0x1c] sm:$0xf]
        %v423 = vld [vmem:[#allocation6 + $0x20] sm:$0xf]
        %v424 = vld [vmem:[#allocation6 + $0x24] sm:$0xf]
        %v425 = vld [vmem:[#allocation6 + $0x28] sm:$0xf]
        %v426 = vld [vmem:[#allocation6 + $0x2c] sm:$0xf]
        %v427 = vld [vmem:[#allocation6 + $0x30] sm:$0xf]
        %v428 = vld [vmem:[#allocation6 + $0x34] sm:$0xf]
        %v429 = vld [vmem:[#allocation6 + $0x38] sm:$0xf]
        %v430 = vld [vmem:[#allocation6 + $0x3c] sm:$0xf]
        %v431 = vld [vmem:[#allocation6 + $0x40] sm:$0xf]
        %v432 = vld [vmem:[#allocation6 + $0x44] sm:$0xf]
        %v433 = vld [vmem:[#allocation6 + $0x48] sm:$0xf]
        %v434 = vld [vmem:[#allocation6 + $0x4c] sm:$0xf]
        %v435 = vld [vmem:[#allocation6 + $0x50] sm:$0xf]
        %v436 = vld [vmem:[#allocation6 + $0x54] sm:$0xf]
        %v437 = vld [vmem:[#allocation6 + $0x58] sm:$0xf]
        %v438 = vld [vmem:[#allocation6 + $0x5c] sm:$0xf]
        %v439 = vld [vmem:[#allocation6 + $0x60] sm:$0xf]
        %v440 = vld [vmem:[#allocation6 + $0x64] sm:$0xf]
        %v441 = vld [vmem:[#allocation6 + $0x68] sm:$0xf]
        %v442 = vld [vmem:[#allocation6 + $0x6c] sm:$0xf]
        %v443 = vld [vmem:[#allocation6 + $0x70] sm:$0xf]
        %v444 = vld [vmem:[#allocation6 + $0x74] sm:$0xf]
        %v445 = vld [vmem:[#allocation6 + $0x78] sm:$0xf]
        %v446 = vld [vmem:[#allocation6 + $0x7c] sm:$0xf]
        %v511 = vunpack.c.l.b16 %v351
        %v512 = vunpack.c.h.b16 %v351
        %v513 = vunpack.c.l.b16 %v352
        %v514 = vunpack.c.h.b16 %v352
        %v515 = vunpack.c.l.b16 %v353
        %v516 = vunpack.c.h.b16 %v353
        %v517 = vunpack.c.l.b16 %v354
        %v518 = vunpack.c.h.b16 %v354
        %v519 = vunpack.c.l.b16 %v355
        %v520 = vunpack.c.h.b16 %v355
        %v521 = vunpack.c.l.b16 %v356
        %v522 = vunpack.c.h.b16 %v356
        %v523 = vunpack.c.l.b16 %v357
        %v524 = vunpack.c.h.b16 %v357
        %v525 = vunpack.c.l.b16 %v358
        %v526 = vunpack.c.h.b16 %v358
        %v527 = vunpack.c.l.b16 %v359
        %v528 = vunpack.c.h.b16 %v359
        %v529 = vunpack.c.l.b16 %v360
        %v530 = vunpack.c.h.b16 %v360
        %v531 = vunpack.c.l.b16 %v361
        %v532 = vunpack.c.h.b16 %v361
        %v533 = vunpack.c.l.b16 %v362
        %v534 = vunpack.c.h.b16 %v362
        %v535 = vunpack.c.l.b16 %v363
        %v536 = vunpack.c.h.b16 %v363
        %v537 = vunpack.c.l.b16 %v364
        %v538 = vunpack.c.h.b16 %v364
        %v539 = vunpack.c.l.b16 %v365
        %v540 = vunpack.c.h.b16 %v365
        %v541 = vunpack.c.l.b16 %v366
        %v542 = vunpack.c.h.b16 %v366
        %v543 = vunpack.c.l.b16 %v367
        %v544 = vunpack.c.h.b16 %v367
        %v545 = vunpack.c.l.b16 %v368
        %v546 = vunpack.c.h.b16 %v368
        %v547 = vunpack.c.l.b16 %v369
        %v548 = vunpack.c.h.b16 %v369
        %v549 = vunpack.c.l.b16 %v370
        %v550 = vunpack.c.h.b16 %v370
        %v551 = vunpack.c.l.b16 %v371
        %v552 = vunpack.c.h.b16 %v371
        %v553 = vunpack.c.l.b16 %v372
        %v554 = vunpack.c.h.b16 %v372
        %v555 = vunpack.c.l.b16 %v373
        %v556 = vunpack.c.h.b16 %v373
        %v557 = vunpack.c.l.b16 %v374
        %v558 = vunpack.c.h.b16 %v374
        %v559 = vunpack.c.l.b16 %v375
        %v560 = vunpack.c.h.b16 %v375
        %v561 = vunpack.c.l.b16 %v376
        %v562 = vunpack.c.h.b16 %v376
        %v563 = vunpack.c.l.b16 %v377
        %v564 = vunpack.c.h.b16 %v377
        %v565 = vunpack.c.l.b16 %v378
        %v566 = vunpack.c.h.b16 %v378
        %v567 = vunpack.c.l.b16 %v379
        %v568 = vunpack.c.h.b16 %v379
        %v569 = vunpack.c.l.b16 %v380
        %v570 = vunpack.c.h.b16 %v380
        %v571 = vunpack.c.l.b16 %v381
        %v572 = vunpack.c.h.b16 %v381
        %v573 = vunpack.c.l.b16 %v382
        %v574 = vunpack.c.h.b16 %v382
        %v575 = vunpack.c.l.b16 %v383
        %v576 = vunpack.c.h.b16 %v383
        %v577 = vunpack.c.l.b16 %v384
        %v578 = vunpack.c.h.b16 %v384
        %v579 = vunpack.c.l.b16 %v385
        %v580 = vunpack.c.h.b16 %v385
        %v581 = vunpack.c.l.b16 %v386
        %v582 = vunpack.c.h.b16 %v386
        %v583 = vunpack.c.l.b16 %v387
        %v584 = vunpack.c.h.b16 %v387
        %v585 = vunpack.c.l.b16 %v388
        %v586 = vunpack.c.h.b16 %v388
        %v587 = vunpack.c.l.b16 %v389
        %v588 = vunpack.c.h.b16 %v389
        %v589 = vunpack.c.l.b16 %v390
        %v590 = vunpack.c.h.b16 %v390
        %v591 = vunpack.c.l.b16 %v391
        %v592 = vunpack.c.h.b16 %v391
        %v593 = vunpack.c.l.b16 %v392
        %v594 = vunpack.c.h.b16 %v392
        %v595 = vunpack.c.l.b16 %v393
        %v596 = vunpack.c.h.b16 %v393
        %v597 = vunpack.c.l.b16 %v394
        %v598 = vunpack.c.h.b16 %v394
        %v599 = vunpack.c.l.b16 %v395
        %v600 = vunpack.c.h.b16 %v395
        %v601 = vunpack.c.l.b16 %v396
        %v602 = vunpack.c.h.b16 %v396
        %v603 = vunpack.c.l.b16 %v397
        %v604 = vunpack.c.h.b16 %v397
        %v605 = vunpack.c.l.b16 %v398
        %v606 = vunpack.c.h.b16 %v398
        %v607 = vunpack.c.l.b16 %v399
        %v608 = vunpack.c.h.b16 %v399
        %v609 = vunpack.c.l.b16 %v400
        %v610 = vunpack.c.h.b16 %v400
        %v611 = vunpack.c.l.b16 %v401
        %v612 = vunpack.c.h.b16 %v401
        %v613 = vunpack.c.l.b16 %v402
        %v614 = vunpack.c.h.b16 %v402
        %v615 = vunpack.c.l.b16 %v403
        %v616 = vunpack.c.h.b16 %v403
        %v617 = vunpack.c.l.b16 %v404
        %v618 = vunpack.c.h.b16 %v404
        %v619 = vunpack.c.l.b16 %v405
        %v620 = vunpack.c.h.b16 %v405
        %v621 = vunpack.c.l.b16 %v406
        %v622 = vunpack.c.h.b16 %v406
        %v623 = vunpack.c.l.b16 %v407
        %v624 = vunpack.c.h.b16 %v407
        %v625 = vunpack.c.l.b16 %v408
        %v626 = vunpack.c.h.b16 %v408
        %v627 = vunpack.c.l.b16 %v409
        %v628 = vunpack.c.h.b16 %v409
        %v629 = vunpack.c.l.b16 %v410
        %v630 = vunpack.c.h.b16 %v410
        %v631 = vunpack.c.l.b16 %v411
        %v632 = vunpack.c.h.b16 %v411
        %v633 = vunpack.c.l.b16 %v412
        %v634 = vunpack.c.h.b16 %v412
        %v635 = vunpack.c.l.b16 %v413
        %v636 = vunpack.c.h.b16 %v413
        %v637 = vunpack.c.l.b16 %v414
        %v638 = vunpack.c.h.b16 %v414
        %v639 = vpack.c.b16 %v513, %v511
        %v640 = vpack.c.b16 %v514, %v512
        %v641 = vpack.c.b16 %v517, %v515
        %v642 = vpack.c.b16 %v518, %v516
        %v643 = vpack.c.b16 %v521, %v519
        %v644 = vpack.c.b16 %v522, %v520
        %v645 = vpack.c.b16 %v525, %v523
        %v646 = vpack.c.b16 %v526, %v524
        %v647 = vpack.c.b16 %v529, %v527
        %v648 = vpack.c.b16 %v530, %v528
        %v649 = vpack.c.b16 %v533, %v531
        %v650 = vpack.c.b16 %v534, %v532
        %v651 = vpack.c.b16 %v537, %v535
        %v652 = vpack.c.b16 %v538, %v536
        %v653 = vpack.c.b16 %v541, %v539
        %v654 = vpack.c.b16 %v542, %v540
        %v655 = vpack.c.b16 %v545, %v543
        %v656 = vpack.c.b16 %v546, %v544
        %v657 = vpack.c.b16 %v549, %v547
        %v658 = vpack.c.b16 %v550, %v548
        %v659 = vpack.c.b16 %v553, %v551
        %v660 = vpack.c.b16 %v554, %v552
        %v661 = vpack.c.b16 %v557, %v555
        %v662 = vpack.c.b16 %v558, %v556
        %v663 = vpack.c.b16 %v561, %v559
        %v664 = vpack.c.b16 %v562, %v560
        %v665 = vpack.c.b16 %v565, %v563
        %v666 = vpack.c.b16 %v566, %v564
        %v667 = vpack.c.b16 %v569, %v567
        %v668 = vpack.c.b16 %v570, %v568
        %v669 = vpack.c.b16 %v573, %v571
        %v670 = vpack.c.b16 %v574, %v572
        %v671 = vpack.c.b16 %v577, %v575
        %v672 = vpack.c.b16 %v578, %v576
        %v673 = vpack.c.b16 %v581, %v579
        %v674 = vpack.c.b16 %v582, %v580
        %v675 = vpack.c.b16 %v585, %v583
        %v676 = vpack.c.b16 %v586, %v584
        %v677 = vpack.c.b16 %v589, %v587
        %v678 = vpack.c.b16 %v590, %v588
        %v679 = vpack.c.b16 %v593, %v591
        %v680 = vpack.c.b16 %v594, %v592
        %v681 = vpack.c.b16 %v597, %v595
        %v682 = vpack.c.b16 %v598, %v596
        %v683 = vpack.c.b16 %v601, %v599
        %v684 = vpack.c.b16 %v602, %v600
        %v685 = vpack.c.b16 %v605, %v603
        %v686 = vpack.c.b16 %v606, %v604
        %v687 = vpack.c.b16 %v609, %v607
        %v688 = vpack.c.b16 %v610, %v608
        %v689 = vpack.c.b16 %v613, %v611
        %v690 = vpack.c.b16 %v614, %v612
        %v691 = vpack.c.b16 %v617, %v615
        %v692 = vpack.c.b16 %v618, %v616
        %v693 = vpack.c.b16 %v621, %v619
        %v694 = vpack.c.b16 %v622, %v620
        %v695 = vpack.c.b16 %v625, %v623
        %v696 = vpack.c.b16 %v626, %v624
        %v697 = vpack.c.b16 %v629, %v627
        %v698 = vpack.c.b16 %v630, %v628
        %v699 = vpack.c.b16 %v633, %v631
        %v700 = vpack.c.b16 %v634, %v632
        %v701 = vpack.c.b16 %v637, %v635
        %v702 = vpack.c.b16 %v638, %v636
        %v799 = vunpack.c.l.b16 %v415
        %v800 = vunpack.c.l.b16 %v416
        %v801 = vunpack.c.l.b16 %v417
        %v802 = vunpack.c.l.b16 %v418
        %v803 = vunpack.c.l.b16 %v419
        %v804 = vunpack.c.l.b16 %v420
        %v805 = vunpack.c.l.b16 %v421
        %v806 = vunpack.c.l.b16 %v422
        %v807 = vunpack.c.l.b16 %v423
        %v808 = vunpack.c.l.b16 %v424
        %v809 = vunpack.c.l.b16 %v425
        %v810 = vunpack.c.l.b16 %v426
        %v811 = vunpack.c.l.b16 %v427
        %v812 = vunpack.c.l.b16 %v428
        %v813 = vunpack.c.l.b16 %v429
        %v814 = vunpack.c.l.b16 %v430
        %v815 = vunpack.c.l.b16 %v431
        %v816 = vunpack.c.l.b16 %v432
        %v817 = vunpack.c.l.b16 %v433
        %v818 = vunpack.c.l.b16 %v434
        %v819 = vunpack.c.l.b16 %v435
        %v820 = vunpack.c.l.b16 %v436
        %v821 = vunpack.c.l.b16 %v437
        %v822 = vunpack.c.l.b16 %v438
        %v823 = vunpack.c.l.b16 %v439
        %v824 = vunpack.c.l.b16 %v440
        %v825 = vunpack.c.l.b16 %v441
        %v826 = vunpack.c.l.b16 %v442
        %v827 = vunpack.c.l.b16 %v443
        %v828 = vunpack.c.l.b16 %v444
        %v829 = vunpack.c.l.b16 %v445
        %v830 = vunpack.c.l.b16 %v446
        %v831 = vpack.c.b16 %v800, %v799
        %v832 = vpack.c.b16 %v802, %v801
        %v833 = vpack.c.b16 %v804, %v803
        %v834 = vpack.c.b16 %v806, %v805
        %v835 = vpack.c.b16 %v808, %v807
        %v836 = vpack.c.b16 %v810, %v809
        %v837 = vpack.c.b16 %v812, %v811
        %v838 = vpack.c.b16 %v814, %v813
        %v839 = vpack.c.b16 %v816, %v815
        %v840 = vpack.c.b16 %v818, %v817
        %v841 = vpack.c.b16 %v820, %v819
        %v842 = vpack.c.b16 %v822, %v821
        %v843 = vpack.c.b16 %v824, %v823
        %v844 = vpack.c.b16 %v826, %v825
        %v845 = vpack.c.b16 %v828, %v827
        %v846 = vpack.c.b16 %v830, %v829
        %863 = vmatprep.subr.bf16.mxu0 0
        %864 = vmatpush1.bf16.msra.mxu0 %v831
        %865 = vmatprep.subr.bf16.mxu0 0
        %866 = vmatpush1.bf16.msra.mxu0 %v832
        %867 = vmatprep.subr.bf16.mxu0 0
        %868 = vmatpush1.bf16.msra.mxu0 %v833
        %869 = vmatprep.subr.bf16.mxu0 0
        %870 = vmatpush1.bf16.msra.mxu0 %v834
        %871 = vmatprep.subr.bf16.mxu0 0
        %872 = vmatpush1.bf16.msra.mxu0 %v835
        %873 = vmatprep.subr.bf16.mxu0 0
        %874 = vmatpush1.bf16.msra.mxu0 %v836
        %875 = vmatprep.subr.bf16.mxu0 0
        %876 = vmatpush1.bf16.msra.mxu0 %v837
        %877 = vmatprep.subr.bf16.mxu0 0
        %878 = vmatpush1.bf16.msra.mxu0 %v838
        %879 = vmatprep.subr.bf16.mxu0 0
        %880 = vmatpush1.bf16.msra.mxu0 %v839
        %881 = vmatprep.subr.bf16.mxu0 0
        %882 = vmatpush1.bf16.msra.mxu0 %v840
        %883 = vmatprep.subr.bf16.mxu0 0
        %884 = vmatpush1.bf16.msra.mxu0 %v841
        %885 = vmatprep.subr.bf16.mxu0 0
        %886 = vmatpush1.bf16.msra.mxu0 %v842
        %887 = vmatprep.subr.bf16.mxu0 0
        %888 = vmatpush1.bf16.msra.mxu0 %v843
        %889 = vmatprep.subr.bf16.mxu0 0
        %890 = vmatpush1.bf16.msra.mxu0 %v844
        %891 = vmatprep.subr.bf16.mxu0 0
        %892 = vmatpush1.bf16.msra.mxu0 %v845
        %893 = vmatprep.subr.bf16.mxu0 0
        %894 = vmatpush1.bf16.msra.mxu0 %v846
        %895 = vmatprep.mubr.bf16.mxu0 %v640
        %896 = vmatmul.mubr.bf16.gmra.mrb[0].mxu0 %v639
        %v897 = vpop.f32.mrb[0].mxu0
        %v898 = vadd.f32 0.0, %v897
        %v899 = vpop.f32.mrb[0].mxu0
        %v900 = vpop.f32.mrb[0].mxu0
        %v901 = vadd.f32 0.0, %v900
        %v902 = vpop.f32.mrb[0].mxu0
        %903 = vmatprep.mubr.bf16.mxu0 %v642
        %904 = vmatmul.mubr.bf16.gmra.mrb[0].mxu0 %v641
        %v905 = vpop.f32.mrb[0].mxu0
        %v906 = vadd.f32 0.0, %v905
        %v907 = vpop.f32.mrb[0].mxu0
        %v908 = vpop.f32.mrb[0].mxu0
        %v909 = vadd.f32 0.0, %v908
        %v910 = vpop.f32.mrb[0].mxu0
        %911 = vmatprep.mubr.bf16.mxu0 %v644
        %912 = vmatmul.mubr.bf16.gmra.mrb[0].mxu0 %v643
        %v913 = vpop.f32.mrb[0].mxu0
        %v914 = vadd.f32 0.0, %v913
        %v915 = vpop.f32.mrb[0].mxu0
        %v916 = vpop.f32.mrb[0].mxu0
        %v917 = vadd.f32 0.0, %v916
        %v918 = vpop.f32.mrb[0].mxu0
        %919 = vmatprep.mubr.bf16.mxu0 %v646
        %920 = vmatmul.mubr.bf16.gmra.mrb[0].mxu0 %v645
        %v921 = vpop.f32.mrb[0].mxu0
        %v922 = vadd.f32 0.0, %v921
        %v923 = vpop.f32.mrb[0].mxu0
        %v924 = vpop.f32.mrb[0].mxu0
        %v925 = vadd.f32 0.0, %v924
        %v926 = vpop.f32.mrb[0].mxu0
        %927 = vmatprep.mubr.bf16.mxu0 %v648
        %928 = vmatmul.mubr.bf16.gmra.mrb[0].mxu0 %v647
        %v929 = vpop.f32.mrb[0].mxu0
        %v930 = vadd.f32 0.0, %v929
        %v931 = vpop.f32.mrb[0].mxu0
        %v932 = vpop.f32.mrb[0].mxu0
        %v933 = vadd.f32 0.0, %v932
        %v934 = vpop.f32.mrb[0].mxu0
        %935 = vmatprep.mubr.bf16.mxu0 %v650
        %936 = vmatmul.mubr.bf16.gmra.mrb[0].mxu0 %v649
        %v937 = vpop.f32.mrb[0].mxu0
        %v938 = vadd.f32 0.0, %v937
        %v939 = vpop.f32.mrb[0].mxu0
        %v940 = vpop.f32.mrb[0].mxu0
        %v941 = vadd.f32 0.0, %v940
        %v942 = vpop.f32.mrb[0].mxu0
        %943 = vmatprep.mubr.bf16.mxu0 %v652
        %944 = vmatmul.mubr.bf16.gmra.mrb[0].mxu0 %v651
        %v945 = vpop.f32.mrb[0].mxu0
        %v946 = vadd.f32 0.0, %v945
        %v947 = vpop.f32.mrb[0].mxu0
        %v948 = vpop.f32.mrb[0].mxu0
        %v949 = vadd.f32 0.0, %v948
        %v950 = vpop.f32.mrb[0].mxu0
        %951 = vmatprep.mubr.bf16.mxu0 %v654
        %952 = vmatmul.mubr.bf16.gmra.mrb[0].mxu0 %v653
        %v953 = vpop.f32.mrb[0].mxu0
        %v954 = vadd.f32 0.0, %v953
        %v955 = vpop.f32.mrb[0].mxu0
        %v956 = vpop.f32.mrb[0].mxu0
        %v957 = vadd.f32 0.0, %v956
        %v958 = vpop.f32.mrb[0].mxu0
        %959 = vmatprep.mubr.bf16.mxu0 %v656
        %960 = vmatmul.mubr.bf16.gmra.mrb[0].mxu0 %v655
        %v961 = vpop.f32.mrb[0].mxu0
        %v962 = vadd.f32 0.0, %v961
        %v963 = vpop.f32.mrb[0].mxu0
        %v964 = vpop.f32.mrb[0].mxu0
        %v965 = vadd.f32 0.0, %v964
        %v966 = vpop.f32.mrb[0].mxu0
        %967 = vmatprep.mubr.bf16.mxu0 %v658
        %968 = vmatmul.mubr.bf16.gmra.mrb[0].mxu0 %v657
        %v969 = vpop.f32.mrb[0].mxu0
        %v970 = vadd.f32 0.0, %v969
        %v971 = vpop.f32.mrb[0].mxu0
        %v972 = vpop.f32.mrb[0].mxu0
        %v973 = vadd.f32 0.0, %v972
        %v974 = vpop.f32.mrb[0].mxu0
        %975 = vmatprep.mubr.bf16.mxu0 %v660
        %976 = vmatmul.mubr.bf16.gmra.mrb[0].mxu0 %v659
        %v977 = vpop.f32.mrb[0].mxu0
        %v978 = vadd.f32 0.0, %v977
        %v979 = vpop.f32.mrb[0].mxu0
        %v980 = vpop.f32.mrb[0].mxu0
        %v981 = vadd.f32 0.0, %v980
        %v982 = vpop.f32.mrb[0].mxu0
        %983 = vmatprep.mubr.bf16.mxu0 %v662
        %984 = vmatmul.mubr.bf16.gmra.mrb[0].mxu0 %v661
        %v985 = vpop.f32.mrb[0].mxu0
        %v986 = vadd.f32 0.0, %v985
        %v987 = vpop.f32.mrb[0].mxu0
        %v988 = vpop.f32.mrb[0].mxu0
        %v989 = vadd.f32 0.0, %v988
        %v990 = vpop.f32.mrb[0].mxu0
        %991 = vmatprep.mubr.bf16.mxu0 %v664
        %992 = vmatmul.mubr.bf16.gmra.mrb[0].mxu0 %v663
        %v993 = vpop.f32.mrb[0].mxu0
        %v994 = vadd.f32 0.0, %v993
        %v995 = vpop.f32.mrb[0].mxu0
        %v996 = vpop.f32.mrb[0].mxu0
        %v997 = vadd.f32 0.0, %v996
        %v998 = vpop.f32.mrb[0].mxu0
        %999 = vmatprep.mubr.bf16.mxu0 %v666
        %1000 = vmatmul.mubr.bf16.gmra.mrb[0].mxu0 %v665
        %v1001 = vpop.f32.mrb[0].mxu0
        %v1002 = vadd.f32 0.0, %v1001
        %v1003 = vpop.f32.mrb[0].mxu0
        %v1004 = vpop.f32.mrb[0].mxu0
        %v1005 = vadd.f32 0.0, %v1004
        %v1006 = vpop.f32.mrb[0].mxu0
        %1007 = vmatprep.mubr.bf16.mxu0 %v668
        %1008 = vmatmul.mubr.bf16.gmra.mrb[0].mxu0 %v667
        %v1009 = vpop.f32.mrb[0].mxu0
        %v1010 = vadd.f32 0.0, %v1009
        %v1011 = vpop.f32.mrb[0].mxu0
        %v1012 = vpop.f32.mrb[0].mxu0
        %v1013 = vadd.f32 0.0, %v1012
        %v1014 = vpop.f32.mrb[0].mxu0
        %1015 = vmatprep.mubr.bf16.mxu0 %v670
        %1016 = vmatmul.mubr.bf16.gmra.mrb[0].mxu0 %v669
        %v1017 = vpop.f32.mrb[0].mxu0
        %v1018 = vadd.f32 0.0, %v1017
        %v1019 = vpop.f32.mrb[0].mxu0
        %v1020 = vpop.f32.mrb[0].mxu0
        %v1021 = vadd.f32 0.0, %v1020
        %v1022 = vpop.f32.mrb[0].mxu0
        %1023 = vmatprep.mubr.bf16.mxu0 %v672
        %1024 = vmatmul.mubr.bf16.gmra.mrb[0].mxu0 %v671
        %v1025 = vpop.f32.mrb[0].mxu0
        %v1026 = vadd.f32 0.0, %v1025
        %v1027 = vpop.f32.mrb[0].mxu0
        %v1028 = vpop.f32.mrb[0].mxu0
        %v1029 = vadd.f32 0.0, %v1028
        %v1030 = vpop.f32.mrb[0].mxu0
        %1031 = vmatprep.mubr.bf16.mxu0 %v674
        %1032 = vmatmul.mubr.bf16.gmra.mrb[0].mxu0 %v673
        %v1033 = vpop.f32.mrb[0].mxu0
        %v1034 = vadd.f32 0.0, %v1033
        %v1035 = vpop.f32.mrb[0].mxu0
        %v1036 = vpop.f32.mrb[0].mxu0
        %v1037 = vadd.f32 0.0, %v1036
        %v1038 = vpop.f32.mrb[0].mxu0
        %1039 = vmatprep.mubr.bf16.mxu0 %v676
        %1040 = vmatmul.mubr.bf16.gmra.mrb[0].mxu0 %v675
        %v1041 = vpop.f32.mrb[0].mxu0
        %v1042 = vadd.f32 0.0, %v1041
        %v1043 = vpop.f32.mrb[0].mxu0
        %v1044 = vpop.f32.mrb[0].mxu0
        %v1045 = vadd.f32 0.0, %v1044
        %v1046 = vpop.f32.mrb[0].mxu0
        %1047 = vmatprep.mubr.bf16.mxu0 %v678
        %1048 = vmatmul.mubr.bf16.gmra.mrb[0].mxu0 %v677
        %v1049 = vpop.f32.mrb[0].mxu0
        %v1050 = vadd.f32 0.0, %v1049
        %v1051 = vpop.f32.mrb[0].mxu0
        %v1052 = vpop.f32.mrb[0].mxu0
        %v1053 = vadd.f32 0.0, %v1052
        %v1054 = vpop.f32.mrb[0].mxu0
        %1055 = vmatprep.mubr.bf16.mxu0 %v680
        %1056 = vmatmul.mubr.bf16.gmra.mrb[0].mxu0 %v679
        %v1057 = vpop.f32.mrb[0].mxu0
        %v1058 = vadd.f32 0.0, %v1057
        %v1059 = vpop.f32.mrb[0].mxu0
        %v1060 = vpop.f32.mrb[0].mxu0
        %v1061 = vadd.f32 0.0, %v1060
        %v1062 = vpop.f32.mrb[0].mxu0
        %1063 = vmatprep.mubr.bf16.mxu0 %v682
        %1064 = vmatmul.mubr.bf16.gmra.mrb[0].mxu0 %v681
        %v1065 = vpop.f32.mrb[0].mxu0
        %v1066 = vadd.f32 0.0, %v1065
        %v1067 = vpop.f32.mrb[0].mxu0
        %v1068 = vpop.f32.mrb[0].mxu0
        %v1069 = vadd.f32 0.0, %v1068
        %v1070 = vpop.f32.mrb[0].mxu0
        %1071 = vmatprep.mubr.bf16.mxu0 %v684
        %1072 = vmatmul.mubr.bf16.gmra.mrb[0].mxu0 %v683
        %v1073 = vpop.f32.mrb[0].mxu0
        %v1074 = vadd.f32 0.0, %v1073
        %v1075 = vpop.f32.mrb[0].mxu0
        %v1076 = vpop.f32.mrb[0].mxu0
        %v1077 = vadd.f32 0.0, %v1076
        %v1078 = vpop.f32.mrb[0].mxu0
        %1079 = vmatprep.mubr.bf16.mxu0 %v686
        %1080 = vmatmul.mubr.bf16.gmra.mrb[0].mxu0 %v685
        %v1081 = vpop.f32.mrb[0].mxu0
        %v1082 = vadd.f32 0.0, %v1081
        %v1083 = vpop.f32.mrb[0].mxu0
        %v1084 = vpop.f32.mrb[0].mxu0
        %v1085 = vadd.f32 0.0, %v1084
        %v1086 = vpop.f32.mrb[0].mxu0
        %1087 = vmatprep.mubr.bf16.mxu0 %v688
        %1088 = vmatmul.mubr.bf16.gmra.mrb[0].mxu0 %v687
        %v1089 = vpop.f32.mrb[0].mxu0
        %v1090 = vadd.f32 0.0, %v1089
        %v1091 = vpop.f32.mrb[0].mxu0
        %v1092 = vpop.f32.mrb[0].mxu0
        %v1093 = vadd.f32 0.0, %v1092
        %v1094 = vpop.f32.mrb[0].mxu0
        %1095 = vmatprep.mubr.bf16.mxu0 %v690
        %1096 = vmatmul.mubr.bf16.gmra.mrb[0].mxu0 %v689
        %v1097 = vpop.f32.mrb[0].mxu0
        %v1098 = vadd.f32 0.0, %v1097
        %v1099 = vpop.f32.mrb[0].mxu0
        %v1100 = vpop.f32.mrb[0].mxu0
        %v1101 = vadd.f32 0.0, %v1100
        %v1102 = vpop.f32.mrb[0].mxu0
        %1103 = vmatprep.mubr.bf16.mxu0 %v692
        %1104 = vmatmul.mubr.bf16.gmra.mrb[0].mxu0 %v691
        %v1105 = vpop.f32.mrb[0].mxu0
        %v1106 = vadd.f32 0.0, %v1105
        %v1107 = vpop.f32.mrb[0].mxu0
        %v1108 = vpop.f32.mrb[0].mxu0
        %v1109 = vadd.f32 0.0, %v1108
        %v1110 = vpop.f32.mrb[0].mxu0
        %1111 = vmatprep.mubr.bf16.mxu0 %v694
        %1112 = vmatmul.mubr.bf16.gmra.mrb[0].mxu0 %v693
        %v1113 = vpop.f32.mrb[0].mxu0
        %v1114 = vadd.f32 0.0, %v1113
        %v1115 = vpop.f32.mrb[0].mxu0
        %v1116 = vpop.f32.mrb[0].mxu0
        %v1117 = vadd.f32 0.0, %v1116
        %v1118 = vpop.f32.mrb[0].mxu0
        %1119 = vmatprep.mubr.bf16.mxu0 %v696
        %1120 = vmatmul.mubr.bf16.gmra.mrb[0].mxu0 %v695
        %v1121 = vpop.f32.mrb[0].mxu0
        %v1122 = vadd.f32 0.0, %v1121
        %v1123 = vpop.f32.mrb[0].mxu0
        %v1124 = vpop.f32.mrb[0].mxu0
        %v1125 = vadd.f32 0.0, %v1124
        %v1126 = vpop.f32.mrb[0].mxu0
        %1127 = vmatprep.mubr.bf16.mxu0 %v698
        %1128 = vmatmul.mubr.bf16.gmra.mrb[0].mxu0 %v697
        %v1129 = vpop.f32.mrb[0].mxu0
        %v1130 = vadd.f32 0.0, %v1129
        %v1131 = vpop.f32.mrb[0].mxu0
        %v1132 = vpop.f32.mrb[0].mxu0
        %v1133 = vadd.f32 0.0, %v1132
        %v1134 = vpop.f32.mrb[0].mxu0
        %1135 = vmatprep.mubr.bf16.mxu0 %v700
        %1136 = vmatmul.mubr.bf16.gmra.mrb[0].mxu0 %v699
        %v1137 = vpop.f32.mrb[0].mxu0
        %v1138 = vadd.f32 0.0, %v1137
        %v1139 = vpop.f32.mrb[0].mxu0
        %v1140 = vpop.f32.mrb[0].mxu0
        %v1141 = vadd.f32 0.0, %v1140
        %v1142 = vpop.f32.mrb[0].mxu0
        %1143 = vmatprep.mubr.bf16.mxu0 %v702
        %1144 = vmatmul.mubr.bf16.gmra.mrb[0].mxu0 %v701
        %v1145 = vpop.f32.mrb[0].mxu0
        %v1146 = vadd.f32 0.0, %v1145
        %v1147 = vpop.f32.mrb[0].mxu0
        %v1148 = vpop.f32.mrb[0].mxu0
        %v1149 = vadd.f32 0.0, %v1148
        %v1150 = vpop.f32.mrb[0].mxu0
        %1151 = vdwg.mxu0
        %v1152 = vadd.f32 %v287, %v898
        %v1153 = vadd.f32 %v288, %v901
        %v1154 = vadd.f32 %v289, %v906
        %v1155 = vadd.f32 %v290, %v909
        %v1156 = vadd.f32 %v291, %v914
        %v1157 = vadd.f32 %v292, %v917
        %v1158 = vadd.f32 %v293, %v922
        %v1159 = vadd.f32 %v294, %v925
        %v1160 = vadd.f32 %v295, %v930
        %v1161 = vadd.f32 %v296, %v933
        %v1162 = vadd.f32 %v297, %v938
        %v1163 = vadd.f32 %v298, %v941
        %v1164 = vadd.f32 %v299, %v946
        %v1165 = vadd.f32 %v300, %v949
        %v1166 = vadd.f32 %v301, %v954
        %v1167 = vadd.f32 %v302, %v957
        %v1168 = vadd.f32 %v303, %v962
        %v1169 = vadd.f32 %v304, %v965
        %v1170 = vadd.f32 %v305, %v970
        %v1171 = vadd.f32 %v306, %v973
        %v1172 = vadd.f32 %v307, %v978
        %v1173 = vadd.f32 %v308, %v981
        %v1174 = vadd.f32 %v309, %v986
        %v1175 = vadd.f32 %v310, %v989
        %v1176 = vadd.f32 %v311, %v994
        %v1177 = vadd.f32 %v312, %v997
        %v1178 = vadd.f32 %v313, %v1002
        %v1179 = vadd.f32 %v314, %v1005
        %v1180 = vadd.f32 %v315, %v1010
        %v1181 = vadd.f32 %v316, %v1013
        %v1182 = vadd.f32 %v317, %v1018
        %v1183 = vadd.f32 %v318, %v1021
        %v1184 = vadd.f32 %v319, %v1026
        %v1185 = vadd.f32 %v320, %v1029
        %v1186 = vadd.f32 %v321, %v1034
        %v1187 = vadd.f32 %v322, %v1037
        %v1188 = vadd.f32 %v323, %v1042
        %v1189 = vadd.f32 %v324, %v1045
        %v1190 = vadd.f32 %v325, %v1050
        %v1191 = vadd.f32 %v326, %v1053
        %v1192 = vadd.f32 %v327, %v1058
        %v1193 = vadd.f32 %v328, %v1061
        %v1194 = vadd.f32 %v329, %v1066
        %v1195 = vadd.f32 %v330, %v1069
        %v1196 = vadd.f32 %v331, %v1074
        %v1197 = vadd.f32 %v332, %v1077
        %v1198 = vadd.f32 %v333, %v1082
        %v1199 = vadd.f32 %v334, %v1085
        %v1200 = vadd.f32 %v335, %v1090
        %v1201 = vadd.f32 %v336, %v1093
        %v1202 = vadd.f32 %v337, %v1098
        %v1203 = vadd.f32 %v338, %v1101
        %v1204 = vadd.f32 %v339, %v1106
        %v1205 = vadd.f32 %v340, %v1109
        %v1206 = vadd.f32 %v341, %v1114
        %v1207 = vadd.f32 %v342, %v1117
        %v1208 = vadd.f32 %v343, %v1122
        %v1209 = vadd.f32 %v344, %v1125
        %v1210 = vadd.f32 %v345, %v1130
        %v1211 = vadd.f32 %v346, %v1133
        %v1212 = vadd.f32 %v347, %v1138
        %v1213 = vadd.f32 %v348, %v1141
        %v1214 = vadd.f32 %v349, %v1146
        %v1215 = vadd.f32 %v350, %v1149
        %1216 = vst [vmem:[#allocation2] sm:$0xff] %v1152
        %1217 = vst [vmem:[#allocation2 + $0x8] sm:$0xff] %v1153
        %1218 = vst [vmem:[#allocation2 + $0x10] sm:$0xff] %v1154
        %1219 = vst [vmem:[#allocation2 + $0x18] sm:$0xff] %v1155
        %1220 = vst [vmem:[#allocation2 + $0x20] sm:$0xff] %v1156
        %1221 = vst [vmem:[#allocation2 + $0x28] sm:$0xff] %v1157
        %1222 = vst [vmem:[#allocation2 + $0x30] sm:$0xff] %v1158
        %1223 = vst [vmem:[#allocation2 + $0x38] sm:$0xff] %v1159
        %1224 = vst [vmem:[#allocation2 + $0x40] sm:$0xff] %v1160
        %1225 = vst [vmem:[#allocation2 + $0x48] sm:$0xff] %v1161
        %1226 = vst [vmem:[#allocation2 + $0x50] sm:$0xff] %v1162
        %1227 = vst [vmem:[#allocation2 + $0x58] sm:$0xff] %v1163
        %1228 = vst [vmem:[#allocation2 + $0x60] sm:$0xff] %v1164
        %1229 = vst [vmem:[#allocation2 + $0x68] sm:$0xff] %v1165
        %1230 = vst [vmem:[#allocation2 + $0x70] sm:$0xff] %v1166
        %1231 = vst [vmem:[#allocation2 + $0x78] sm:$0xff] %v1167
        %1232 = vst [vmem:[#allocation2 + $0x80] sm:$0xff] %v1168
        %1233 = vst [vmem:[#allocation2 + $0x88] sm:$0xff] %v1169
        %1234 = vst [vmem:[#allocation2 + $0x90] sm:$0xff] %v1170
        %1235 = vst [vmem:[#allocation2 + $0x98] sm:$0xff] %v1171
        %1236 = vst [vmem:[#allocation2 + $0xa0] sm:$0xff] %v1172
        %1237 = vst [vmem:[#allocation2 + $0xa8] sm:$0xff] %v1173
        %1238 = vst [vmem:[#allocation2 + $0xb0] sm:$0xff] %v1174
        %1239 = vst [vmem:[#allocation2 + $0xb8] sm:$0xff] %v1175
        %1240 = vst [vmem:[#allocation2 + $0xc0] sm:$0xff] %v1176
        %1241 = vst [vmem:[#allocation2 + $0xc8] sm:$0xff] %v1177
        %1242 = vst [vmem:[#allocation2 + $0xd0] sm:$0xff] %v1178
        %1243 = vst [vmem:[#allocation2 + $0xd8] sm:$0xff] %v1179
        %1244 = vst [vmem:[#allocation2 + $0xe0] sm:$0xff] %v1180
        %1245 = vst [vmem:[#allocation2 + $0xe8] sm:$0xff] %v1181
        %1246 = vst [vmem:[#allocation2 + $0xf0] sm:$0xff] %v1182
        %1247 = vst [vmem:[#allocation2 + $0xf8] sm:$0xff] %v1183
        %1248 = vst [vmem:[#allocation2 + $0x100] sm:$0xff] %v1184
        %1249 = vst [vmem:[#allocation2 + $0x108] sm:$0xff] %v1185
        %1250 = vst [vmem:[#allocation2 + $0x110] sm:$0xff] %v1186
        %1251 = vst [vmem:[#allocation2 + $0x118] sm:$0xff] %v1187
        %1252 = vst [vmem:[#allocation2 + $0x120] sm:$0xff] %v1188
        %1253 = vst [vmem:[#allocation2 + $0x128] sm:$0xff] %v1189
        %1254 = vst [vmem:[#allocation2 + $0x130] sm:$0xff] %v1190
        %1255 = vst [vmem:[#allocation2 + $0x138] sm:$0xff] %v1191
        %1256 = vst [vmem:[#allocation2 + $0x140] sm:$0xff] %v1192
        %1257 = vst [vmem:[#allocation2 + $0x148] sm:$0xff] %v1193
        %1258 = vst [vmem:[#allocation2 + $0x150] sm:$0xff] %v1194
        %1259 = vst [vmem:[#allocation2 + $0x158] sm:$0xff] %v1195
        %1260 = vst [vmem:[#allocation2 + $0x160] sm:$0xff] %v1196
        %1261 = vst [vmem:[#allocation2 + $0x168] sm:$0xff] %v1197
        %1262 = vst [vmem:[#allocation2 + $0x170] sm:$0xff] %v1198
        %1263 = vst [vmem:[#allocation2 + $0x178] sm:$0xff] %v1199
        %1264 = vst [vmem:[#allocation2 + $0x180] sm:$0xff] %v1200
        %1265 = vst [vmem:[#allocation2 + $0x188] sm:$0xff] %v1201
        %1266 = vst [vmem:[#allocation2 + $0x190] sm:$0xff] %v1202
        %1267 = vst [vmem:[#allocation2 + $0x198] sm:$0xff] %v1203
        %1268 = vst [vmem:[#allocation2 + $0x1a0] sm:$0xff] %v1204
        %1269 = vst [vmem:[#allocation2 + $0x1a8] sm:$0xff] %v1205
        %1270 = vst [vmem:[#allocation2 + $0x1b0] sm:$0xff] %v1206
        %1271 = vst [vmem:[#allocation2 + $0x1b8] sm:$0xff] %v1207
        %1272 = vst [vmem:[#allocation2 + $0x1c0] sm:$0xff] %v1208
        %1273 = vst [vmem:[#allocation2 + $0x1c8] sm:$0xff] %v1209
        %1274 = vst [vmem:[#allocation2 + $0x1d0] sm:$0xff] %v1210
        %1275 = vst [vmem:[#allocation2 + $0x1d8] sm:$0xff] %v1211
        %1276 = vst [vmem:[#allocation2 + $0x1e0] sm:$0xff] %v1212
        %1277 = vst [vmem:[#allocation2 + $0x1e8] sm:$0xff] %v1213
        %1278 = vst [vmem:[#allocation2 + $0x1f0] sm:$0xff] %v1214
        %1279 = vst [vmem:[#allocation2 + $0x1f8] sm:$0xff] %v1215
        // Predicated region
        $region41: #{tpu_custom_call.1} parent=27 // pred_check
          %p1280 = pneg %p219
        $region42: #{tpu_custom_call.1} parent=27 // pred_check_branch
          %1282 = sbr.rel (%p1280) target = $region44
        $region43: #{tpu_custom_call.1} parent=27 // pred_region
          %v1283 = vld [vmem:[#allocation2] sm:$0xff]
          %v1284 = vld [vmem:[#allocation2 + $0x8] sm:$0xff]
          %v1285 = vld [vmem:[#allocation2 + $0x10] sm:$0xff]
          %v1286 = vld [vmem:[#allocation2 + $0x18] sm:$0xff]
          %v1287 = vld [vmem:[#allocation2 + $0x20] sm:$0xff]
          %v1288 = vld [vmem:[#allocation2 + $0x28] sm:$0xff]
          %v1289 = vld [vmem:[#allocation2 + $0x30] sm:$0xff]
          %v1290 = vld [vmem:[#allocation2 + $0x38] sm:$0xff]
          %v1291 = vld [vmem:[#allocation2 + $0x40] sm:$0xff]
          %v1292 = vld [vmem:[#allocation2 + $0x48] sm:$0xff]
          %v1293 = vld [vmem:[#allocation2 + $0x50] sm:$0xff]
          %v1294 = vld [vmem:[#allocation2 + $0x58] sm:$0xff]
          %v1295 = vld [vmem:[#allocation2 + $0x60] sm:$0xff]
          %v1296 = vld [vmem:[#allocation2 + $0x68] sm:$0xff]
          %v1297 = vld [vmem:[#allocation2 + $0x70] sm:$0xff]
          %v1298 = vld [vmem:[#allocation2 + $0x78] sm:$0xff]
          %v1299 = vld [vmem:[#allocation2 + $0x80] sm:$0xff]
          %v1300 = vld [vmem:[#allocation2 + $0x88] sm:$0xff]
          %v1301 = vld [vmem:[#allocation2 + $0x90] sm:$0xff]
          %v1302 = vld [vmem:[#allocation2 + $0x98] sm:$0xff]
          %v1303 = vld [vmem:[#allocation2 + $0xa0] sm:$0xff]
          %v1304 = vld [vmem:[#allocation2 + $0xa8] sm:$0xff]
          %v1305 = vld [vmem:[#allocation2 + $0xb0] sm:$0xff]
          %v1306 = vld [vmem:[#allocation2 + $0xb8] sm:$0xff]
          %v1307 = vld [vmem:[#allocation2 + $0xc0] sm:$0xff]
          %v1308 = vld [vmem:[#allocation2 + $0xc8] sm:$0xff]
          %v1309 = vld [vmem:[#allocation2 + $0xd0] sm:$0xff]
          %v1310 = vld [vmem:[#allocation2 + $0xd8] sm:$0xff]
          %v1311 = vld [vmem:[#allocation2 + $0xe0] sm:$0xff]
          %v1312 = vld [vmem:[#allocation2 + $0xe8] sm:$0xff]
          %v1313 = vld [vmem:[#allocation2 + $0xf0] sm:$0xff]
          %v1314 = vld [vmem:[#allocation2 + $0xf8] sm:$0xff]
          %v1315 = vld [vmem:[#allocation2 + $0x100] sm:$0xff]
          %v1316 = vld [vmem:[#allocation2 + $0x108] sm:$0xff]
          %v1317 = vld [vmem:[#allocation2 + $0x110] sm:$0xff]
          %v1318 = vld [vmem:[#allocation2 + $0x118] sm:$0xff]
          %v1319 = vld [vmem:[#allocation2 + $0x120] sm:$0xff]
          %v1320 = vld [vmem:[#allocation2 + $0x128] sm:$0xff]
          %v1321 = vld [vmem:[#allocation2 + $0x130] sm:$0xff]
          %v1322 = vld [vmem:[#allocation2 + $0x138] sm:$0xff]
          %v1323 = vld [vmem:[#allocation2 + $0x140] sm:$0xff]
          %v1324 = vld [vmem:[#allocation2 + $0x148] sm:$0xff]
          %v1325 = vld [vmem:[#allocation2 + $0x150] sm:$0xff]
          %v1326 = vld [vmem:[#allocation2 + $0x158] sm:$0xff]
          %v1327 = vld [vmem:[#allocation2 + $0x160] sm:$0xff]
          %v1328 = vld [vmem:[#allocation2 + $0x168] sm:$0xff]
          %v1329 = vld [vmem:[#allocation2 + $0x170] sm:$0xff]
          %v1330 = vld [vmem:[#allocation2 + $0x178] sm:$0xff]
          %v1331 = vld [vmem:[#allocation2 + $0x180] sm:$0xff]
          %v1332 = vld [vmem:[#allocation2 + $0x188] sm:$0xff]
          %v1333 = vld [vmem:[#allocation2 + $0x190] sm:$0xff]
          %v1334 = vld [vmem:[#allocation2 + $0x198] sm:$0xff]
          %v1335 = vld [vmem:[#allocation2 + $0x1a0] sm:$0xff]
          %v1336 = vld [vmem:[#allocation2 + $0x1a8] sm:$0xff]
          %v1337 = vld [vmem:[#allocation2 + $0x1b0] sm:$0xff]
          %v1338 = vld [vmem:[#allocation2 + $0x1b8] sm:$0xff]
          %v1339 = vld [vmem:[#allocation2 + $0x1c0] sm:$0xff]
          %v1340 = vld [vmem:[#allocation2 + $0x1c8] sm:$0xff]
          %v1341 = vld [vmem:[#allocation2 + $0x1d0] sm:$0xff]
          %v1342 = vld [vmem:[#allocation2 + $0x1d8] sm:$0xff]
          %v1343 = vld [vmem:[#allocation2 + $0x1e0] sm:$0xff]
          %v1344 = vld [vmem:[#allocation2 + $0x1e8] sm:$0xff]
          %v1345 = vld [vmem:[#allocation2 + $0x1f0] sm:$0xff]
          %v1346 = vld [vmem:[#allocation2 + $0x1f8] sm:$0xff]
          %1347 = vst [vmem:[%s213] sm:$0xff] %v1283
          %1348 = vst [vmem:[%s213 + $0x8] sm:$0xff] %v1284
          %1349 = vst [vmem:[%s213 + $0x10] sm:$0xff] %v1285
          %1350 = vst [vmem:[%s213 + $0x18] sm:$0xff] %v1286
          %1351 = vst [vmem:[%s213 + $0x20] sm:$0xff] %v1287
          %1352 = vst [vmem:[%s213 + $0x28] sm:$0xff] %v1288
          %1353 = vst [vmem:[%s213 + $0x30] sm:$0xff] %v1289
          %1354 = vst [vmem:[%s213 + $0x38] sm:$0xff] %v1290
          %1355 = vst [vmem:[%s213 + $0x40] sm:$0xff] %v1291
          %1356 = vst [vmem:[%s213 + $0x48] sm:$0xff] %v1292
          %1357 = vst [vmem:[%s213 + $0x50] sm:$0xff] %v1293
          %1358 = vst [vmem:[%s213 + $0x58] sm:$0xff] %v1294
          %1359 = vst [vmem:[%s213 + $0x60] sm:$0xff] %v1295
          %1360 = vst [vmem:[%s213 + $0x68] sm:$0xff] %v1296
          %1361 = vst [vmem:[%s213 + $0x70] sm:$0xff] %v1297
          %1362 = vst [vmem:[%s213 + $0x78] sm:$0xff] %v1298
          %1363 = vst [vmem:[%s213 + $0x80] sm:$0xff] %v1299
          %1364 = vst [vmem:[%s213 + $0x88] sm:$0xff] %v1300
          %1365 = vst [vmem:[%s213 + $0x90] sm:$0xff] %v1301
          %1366 = vst [vmem:[%s213 + $0x98] sm:$0xff] %v1302
          %1367 = vst [vmem:[%s213 + $0xa0] sm:$0xff] %v1303
          %1368 = vst [vmem:[%s213 + $0xa8] sm:$0xff] %v1304
          %1369 = vst [vmem:[%s213 + $0xb0] sm:$0xff] %v1305
          %1370 = vst [vmem:[%s213 + $0xb8] sm:$0xff] %v1306
          %1371 = vst [vmem:[%s213 + $0xc0] sm:$0xff] %v1307
          %1372 = vst [vmem:[%s213 + $0xc8] sm:$0xff] %v1308
          %1373 = vst [vmem:[%s213 + $0xd0] sm:$0xff] %v1309
          %1374 = vst [vmem:[%s213 + $0xd8] sm:$0xff] %v1310
          %1375 = vst [vmem:[%s213 + $0xe0] sm:$0xff] %v1311
          %1376 = vst [vmem:[%s213 + $0xe8] sm:$0xff] %v1312
          %1377 = vst [vmem:[%s213 + $0xf0] sm:$0xff] %v1313
          %1378 = vst [vmem:[%s213 + $0xf8] sm:$0xff] %v1314
          %1379 = vst [vmem:[%s213 + $0x100] sm:$0xff] %v1315
          %1380 = vst [vmem:[%s213 + $0x108] sm:$0xff] %v1316
          %1381 = vst [vmem:[%s213 + $0x110] sm:$0xff] %v1317
          %1382 = vst [vmem:[%s213 + $0x118] sm:$0xff] %v1318
          %1383 = vst [vmem:[%s213 + $0x120] sm:$0xff] %v1319
          %1384 = vst [vmem:[%s213 + $0x128] sm:$0xff] %v1320
          %1385 = vst [vmem:[%s213 + $0x130] sm:$0xff] %v1321
          %1386 = vst [vmem:[%s213 + $0x138] sm:$0xff] %v1322
          %1387 = vst [vmem:[%s213 + $0x140] sm:$0xff] %v1323
          %1388 = vst [vmem:[%s213 + $0x148] sm:$0xff] %v1324
          %1389 = vst [vmem:[%s213 + $0x150] sm:$0xff] %v1325
          %1390 = vst [vmem:[%s213 + $0x158] sm:$0xff] %v1326
          %1391 = vst [vmem:[%s213 + $0x160] sm:$0xff] %v1327
          %1392 = vst [vmem:[%s213 + $0x168] sm:$0xff] %v1328
          %1393 = vst [vmem:[%s213 + $0x170] sm:$0xff] %v1329
          %1394 = vst [vmem:[%s213 + $0x178] sm:$0xff] %v1330
          %1395 = vst [vmem:[%s213 + $0x180] sm:$0xff] %v1331
          %1396 = vst [vmem:[%s213 + $0x188] sm:$0xff] %v1332
          %1397 = vst [vmem:[%s213 + $0x190] sm:$0xff] %v1333
          %1398 = vst [vmem:[%s213 + $0x198] sm:$0xff] %v1334
          %1399 = vst [vmem:[%s213 + $0x1a0] sm:$0xff] %v1335
          %1400 = vst [vmem:[%s213 + $0x1a8] sm:$0xff] %v1336
          %1401 = vst [vmem:[%s213 + $0x1b0] sm:$0xff] %v1337
          %1402 = vst [vmem:[%s213 + $0x1b8] sm:$0xff] %v1338
          %1403 = vst [vmem:[%s213 + $0x1c0] sm:$0xff] %v1339
          %1404 = vst [vmem:[%s213 + $0x1c8] sm:$0xff] %v1340
          %1405 = vst [vmem:[%s213 + $0x1d0] sm:$0xff] %v1341
          %1406 = vst [vmem:[%s213 + $0x1d8] sm:$0xff] %v1342
          %1407 = vst [vmem:[%s213 + $0x1e0] sm:$0xff] %v1343
          %1408 = vst [vmem:[%s213 + $0x1e8] sm:$0xff] %v1344
          %1409 = vst [vmem:[%s213 + $0x1f0] sm:$0xff] %v1345
          %1410 = vst [vmem:[%s213 + $0x1f8] sm:$0xff] %v1346
        $region44: #{tpu_custom_call.1} parent=27 // pred_fallthru
          _
        %s1411 = sand.u32 %s105, 1
        %s1412 = scalar_lea.sflag [#allocation5], %s1411
        %s1413 = sand.u32 %s105, 1
        %s1414 = smul.addr %s1413, 512
        %s1415 = scalar_lea.vmem [#allocation8], %s1414
        // Predicated region
        $region45: #{tpu_custom_call.1} parent=27 // pred_check
          %p1416 = pneg %p115
        $region46: #{tpu_custom_call.1} parent=27 // pred_check_branch
          %1418 = sbr.rel (%p1416) target = $region48
        $region47: #{tpu_custom_call.1} parent=27 // pred_region
          %s1419 = smul.u32 64, %s25
          %s1421 = ssub.s32 8192, 8192
          %1422 = vsyncadd %s1412, %s1421
          %s1423 = sadd.s32 %s26, %s1419
          %s1424 = smul.addr %s1423, 128
          %s1425 = scalar_lea.hbm %s2, %s1424
          %s1426 = sshll.u32 %s1415, 4
          %s1427 = int_to_ptr.vmem [resolvable:$true] %s1426
          %1432 = dma.vmem_to_hbm [thread:$0]  %s1427, 8192, %s1425, %s1412, 128, 128, 8
        $region48: #{tpu_custom_call.1} parent=27 // pred_fallthru
          _
      $region28: #{tpu_custom_call.1} parent=5 // pred_fallthru
        _
      %p1433 = scmp.le.s32.totalorder 2, %s15
      // Predicated region
      $region49: #{tpu_custom_call.1} parent=5 // pred_check
        %p1434 = pneg %p1433
      $region50: #{tpu_custom_call.1} parent=5 // pred_check_branch
        %1436 = sbr.rel (%p1434) target = $region52
      $region51: #{tpu_custom_call.1} parent=5 // pred_region
        %s1437 = ssub.s32 %s15, 2
        // Predicated region
        $region53: #{tpu_custom_call.1} parent=51 // pred_check
          %p1438 = pneg %p121
        $region54: #{tpu_custom_call.1} parent=51 // pred_check_branch
          %1440 = sbr.rel (%p1438) target = $region56
        $region55: #{tpu_custom_call.1} parent=51 // pred_region
          %s1441 = sand.u32 %s106, 1
          %s1442 = scalar_lea.sflag [#allocation5], %s1441
          %s1443 = sand.u32 %s106, 1
          %s1444 = smul.addr %s1443, 512
          %s1445 = scalar_lea.vmem [#allocation8], %s1444
          %1446 = dma.done %s1442, 8192
        $region56: #{tpu_custom_call.1} parent=51 // pred_fallthru
          _
      $region52: #{tpu_custom_call.1} parent=5 // pred_fallthru
        _
    $region6: #{tpu_custom_call.1} parent=1 // loop_footer
      %s19 = sadd.s32 1, %s15
    $region7: #{tpu_custom_call.1} parent=1 // loop_footer_branch
      %14 = sbr.rel target = $region3
    $region8: #{tpu_custom_call.1} parent=1 // loop_exit
      _
    %1447 = vsyncpa [#allocation4], 1
    %s1448 = scalar_lea.sflag [#allocation4], 1
    %1449 = vsyncpa %s1448, 1
    %1450 = vsyncpa [#allocation7], 1
    %1451 = vsyncpa [#allocation5], 1
    %s1452 = scalar_lea.sflag [#allocation5], 1
    %1453 = vsyncpa %s1452, 1

</llo_original>
